<compile_context>
chip_gen: v6e
topology: v6e:2x2x1
jax: 0.10.0
libtpu: 0.0.40
codegen_flags: <defaults>
</compile_context>

<pallas_src>
import jax
import jax.numpy as jnp
from jax.experimental import pallas as pl
from jax.experimental.pallas import tpu as pltpu

IN_FEATURES = 2048  # fixed by the module (fc1 = nn.Linear(2048, hidden_units))
NEG_PAD = -1e30     # finite large-negative for padded class columns (avoids inf-inf NaN)


def _round_up(a, m):
    return (a + m - 1) // m * m


def feedforward_kernel(x_ref, w1_ref, b1_ref, w2_ref, b2_ref, o_ref, acc_ref):
    k = pl.program_id(1)

    @pl.when(k == 0)
    def _():
        acc_ref[...] = jnp.zeros_like(acc_ref)

    # fc1 partial: (TB, 2048) @ (2048, TH) -> f32 on the MXU; x cast to bf16 in-kernel.
    xb = x_ref[...].astype(jnp.bfloat16)
    h1 = jnp.dot(xb, w1_ref[...], preferred_element_type=jnp.float32)
    # bias + ReLU in f32 (elementwise along H, safe per hidden tile).
    h1 = jnp.maximum(h1 + b1_ref[...], 0.0)
    # Dropout(p=0.18): inference/eval semantics -> identity.

    # fc2 partial: (TB, TH) @ (TH, Op), accumulated in f32 VMEM scratch.
    acc_ref[...] += jnp.dot(h1.astype(jnp.bfloat16), w2_ref[...],
                            preferred_element_type=jnp.float32)

    @pl.when(k == pl.num_programs(1) - 1)
    def _():
        h2 = acc_ref[...] + b2_ref[...]   # padded classes get ~NEG_PAD -> exp() == 0
        # numerically stable log_softmax over dim=1 (class axis), once per batch tile
        m = jnp.max(h2, axis=-1, keepdims=True)
        z = h2 - m
        lse = jnp.log(jnp.sum(jnp.exp(z), axis=-1, keepdims=True))
        o_ref[...] = (z - lse).astype(o_ref.dtype)


def prepare_params(w1, b1, w2, b2, *, tile_h=None):
    """One-time weight preparation (cast + pad).  Do NOT call per forward pass.

    w1: (2048, H); b1: (H,) or (1, H); w2: (H, O); b2: (O,) or (1, O).
    Returns a dict of pre-padded, pre-cast arrays plus tiling metadata.
    """
    H = w1.shape[1]
    O = w2.shape[1]
    if tile_h is None:
        # Big tiles amortize grid-step overhead; 1024 keeps double-buffered w1 tiles
        # (2 x 4 MiB) comfortably inside the v7x 64 MiB VMEM budget as well.
        tile_h = min(1024, _round_up(H, 128))
    Hp = _round_up(H, tile_h)
    Op = _round_up(O, 128)  # lane-dense output

    # Zero hidden padding contributes nothing: relu(0 + 0) = 0 and padded w2 rows are 0.
    w1p = jnp.pad(w1.astype(jnp.bfloat16), ((0, 0), (0, Hp - H)))
    b1p = jnp.pad(b1.astype(jnp.float32).reshape(1, H), ((0, 0), (0, Hp - H)))
    # Padded class columns: zero weights + NEG_PAD bias -> exp() == 0 in log_softmax,
    # so real-class outputs are exactly the O-class log_softmax.
    w2p = jnp.pad(w2.astype(jnp.bfloat16), ((0, Hp - H), (0, Op - O)))
    b2p = jnp.pad(b2.astype(jnp.float32).reshape(1, O), ((0, 0), (0, Op - O)),
                  constant_values=NEG_PAD)

    return dict(w1=w1p, b1=b1p, w2=w2p, b2=b2p,
                H=H, O=O, Hp=Hp, Op=Op, tile_h=tile_h)


def feedforward(x, params, *, tile_b=None):
    """x: (B, 2048) f32; params from prepare_params(). Returns (B, O) f32 log-probs."""
    B, K = x.shape
    assert K == IN_FEATURES
    Hp, Op, O, tile_h = params["Hp"], params["Op"], params["O"], params["tile_h"]

    if tile_b is None:
        # Multiple of 16 (bf16 sublane packing), up to 256 (fills v6e/v7x 256-wide MXU).
        # Keeping the batch in one block streams w1 exactly once (dominant HBM traffic).
        tile_b = min(256, _round_up(B, 16))
    assert tile_b % 16 == 0, "tile_b must be a multiple of 16 (bf16 packing)"

    Bp = _round_up(B, tile_b)
    xp = jnp.pad(x.astype(jnp.float32), ((0, Bp - B), (0, 0))) if Bp != B else x.astype(jnp.float32)

    grid = (Bp // tile_b, Hp // tile_h)

    out = pl.pallas_call(
        feedforward_kernel,
        out_shape=jax.ShapeDtypeStruct((Bp, Op), jnp.float32),
        grid_spec=pltpu.PrefetchScalarGridSpec(
            num_scalar_prefetch=0,
            grid=grid,
            in_specs=[
                pl.BlockSpec((tile_b, IN_FEATURES), lambda i, k: (i, 0)),  # x (resident per i)
                pl.BlockSpec((IN_FEATURES, tile_h), lambda i, k: (0, k)),  # w1 column tile (bf16)
                pl.BlockSpec((1, tile_h), lambda i, k: (0, k)),            # b1 tile (f32)
                pl.BlockSpec((tile_h, Op), lambda i, k: (k, 0)),           # w2 row tile (bf16)
                pl.BlockSpec((1, Op), lambda i, k: (0, 0)),                # b2 (whole, f32)
            ],
            out_specs=pl.BlockSpec((tile_b, Op), lambda i, k: (i, 0)),     # lane-dense output
            scratch_shapes=[pltpu.VMEM((tile_b, Op), jnp.float32)],
        ),
        compiler_params=pltpu.CompilerParams(
            dimension_semantics=("parallel", "arbitrary"),
            vmem_limit_bytes=48 << 20,  # headroom for tile_h=1024; still safe on v7x (64 MiB/TC)
        ),
    )(xp, params["w1"], params["b1"], params["w2"], params["b2"])

    return out[:B, :O]


def init_params(key, hidden_units, output):
    """Deterministic init mimicking nn.Linear's uniform(-1/sqrt(fan_in), 1/sqrt(fan_in))."""
    k1, k2, k3, k4 = jax.random.split(key, 4)
    bound1 = 1.0 / (IN_FEATURES ** 0.5)
    bound2 = 1.0 / (hidden_units ** 0.5)
    # stored as (in, out) — transpose of PyTorch's (out, in) weight
    w1 = jax.random.uniform(k1, (IN_FEATURES, hidden_units), jnp.float32, -bound1, bound1)
    b1 = jax.random.uniform(k2, (hidden_units,), jnp.float32, -bound1, bound1)
    w2 = jax.random.uniform(k3, (hidden_units, output), jnp.float32, -bound2, bound2)
    b2 = jax.random.uniform(k4, (output,), jnp.float32, -bound2, bound2)
    return w1, b1, w2, b2


def _reference(x, w1, b1, w2, b2):
    # pure-JAX reference with the same bf16 matmul-operand casts (f32 accumulation)
    h1 = jnp.maximum(
        jnp.dot(x.astype(jnp.bfloat16), w1.astype(jnp.bfloat16),
                preferred_element_type=jnp.float32) + b1.reshape(1, -1), 0.0)
    h2 = jnp.dot(h1.astype(jnp.bfloat16), w2.astype(jnp.bfloat16),
                 preferred_element_type=jnp.float32) + b2.reshape(1, -1)
    return jax.nn.log_softmax(h2, axis=1)


if __name__ == "__main__":
    key = jax.random.PRNGKey(0)
    kx, kp = jax.random.split(key)

    batch = 16
    hidden_units = 256
    output = 16

    x = jax.random.normal(kx, (batch, IN_FEATURES), jnp.float32)
    w1, b1, w2, b2 = init_params(kp, hidden_units, output)
    ref = _reference(x, w1, b1, w2, b2)

    # Default tiling: single batch block (w1 streamed once), single hidden step.
    params = prepare_params(w1, b1, w2, b2)
    out = jax.block_until_ready(feedforward(x, params))
    assert out.shape == (batch, output)
    assert jnp.allclose(out, ref, atol=2e-3, rtol=2e-3), float(jnp.max(jnp.abs(out - ref)))

    # Small hidden tile to exercise the H-reduction grid axis (accumulator path).
    params_small = prepare_params(w1, b1, w2, b2, tile_h=128)
    out2 = jax.block_until_ready(feedforward(x, params_small, tile_b=16))
    assert jnp.allclose(out2, ref, atol=2e-3, rtol=2e-3), float(jnp.max(jnp.abs(out2 - ref)))

    # Ragged batch (B not a multiple of 16) exercises the zero-padded batch rows.
    xr = jax.random.normal(jax.random.PRNGKey(1), (10, IN_FEATURES), jnp.float32)
    refr = _reference(xr, w1, b1, w2, b2)
    out3 = jax.block_until_ready(feedforward(xr, params))
    assert out3.shape == (10, output)
    assert jnp.allclose(out3, refr, atol=2e-3, rtol=2e-3), float(jnp.max(jnp.abs(out3 - refr)))

    print("KERNEL_OK")
</pallas_src>

<mosaic_0001>
module attributes {stable_mosaic.version = 11 : i64} {
  func.func @feedforward_kernel(%arg0: i32, %arg1: i32, %arg2: memref<16x2048xf32, #tpu.memory_space<vmem>>, %arg3: memref<2048x256xbf16, #tpu.memory_space<vmem>>, %arg4: memref<1x256xf32, #tpu.memory_space<vmem>>, %arg5: memref<256x128xbf16, #tpu.memory_space<vmem>>, %arg6: memref<1x128xf32, #tpu.memory_space<vmem>>, %arg7: memref<16x128xf32, #tpu.memory_space<vmem>>, %arg8: memref<16x128xf32, #tpu.memory_space<vmem>>) attributes {dimension_semantics = [#tpu.dimension_semantics<parallel>, #tpu.dimension_semantics<arbitrary>], iteration_bounds = array<i64: 1, 1>, scalar_prefetch = 0 : i64, scratch_operands = 1 : i64, tpu.core_type = #tpu.core_type<tc>, window_params = [{transform_indices = @transform_0, window_bounds = array<i64: 16, 2048>}, {transform_indices = @transform_1, window_bounds = array<i64: 2048, 256>}, {transform_indices = @transform_2, window_bounds = array<i64: 1, 256>}, {transform_indices = @transform_3, window_bounds = array<i64: 256, 128>}, {pipeline_mode = #tpu.pipeline_mode<synchronous>, transform_indices = @transform_4, window_bounds = array<i64: 1, 128>}, {transform_indices = @transform_5, window_bounds = array<i64: 16, 128>}]} {
    %c0_i32 = arith.constant 0 : i32
    %0 = arith.cmpi eq, %arg1, %c0_i32 : i32
    %1 = arith.extui %0 : i1 to i32
    %c0_i32_0 = arith.constant 0 : i32
    %2 = arith.cmpi ne, %1, %c0_i32_0 : i32
    scf.if %2 {
      %cst_16 = arith.constant 0.000000e+00 : f32
      %21 = vector.broadcast %cst_16 : f32 to vector<16x128xf32>
      %c0_17 = arith.constant 0 : index
      %c0_18 = arith.constant 0 : index
      %22 = vector.load %arg8[%c0_17, %c0_18] : memref<16x128xf32, #tpu.memory_space<vmem>>, vector<16x128xf32>
      tpu.vector_store %arg8[%c0_17, %c0_18], %21 {strides = array<i32>} : memref<16x128xf32, #tpu.memory_space<vmem>>, vector<16x128xf32>,
    } else {
    }
    %c0 = arith.constant 0 : index
    %c0_1 = arith.constant 0 : index
    %3 = vector.load %arg2[%c0, %c0_1] : memref<16x2048xf32, #tpu.memory_space<vmem>>, vector<16x2048xf32>
    %4 = arith.truncf %3 : vector<16x2048xf32> to vector<16x2048xbf16>
    %c0_2 = arith.constant 0 : index
    %c0_3 = arith.constant 0 : index
    %5 = vector.load %arg3[%c0_2, %c0_3] : memref<2048x256xbf16, #tpu.memory_space<vmem>>, vector<2048x256xbf16>
    %cst = arith.constant dense<0.000000e+00> : vector<16x256xf32>
    %6 = tpu.matmul %4, %5, %cst {dimension_numbers = #tpu.dot_dimension_numbers<[1], [0], [0], [1], [0, 0, 1, 1], [], []>} : vector<16x2048xbf16>, vector<2048x256xbf16>, vector<16x256xf32> -> vector<16x256xf32>
    %c0_4 = arith.constant 0 : index
    %c0_5 = arith.constant 0 : index
    %7 = vector.load %arg4[%c0_4, %c0_5] : memref<1x256xf32, #tpu.memory_space<vmem>>, vector<1x256xf32>
    %8 = vector.broadcast %7 : vector<1x256xf32> to vector<16x256xf32>
    %9 = arith.addf %6, %8 : vector<16x256xf32>
    %cst_6 = arith.constant 0.000000e+00 : f32
    %10 = vector.broadcast %cst_6 : f32 to vector<16x256xf32>
    %11 = arith.maximumf %9, %10 : vector<16x256xf32>
    %c0_7 = arith.constant 0 : index
    %c0_8 = arith.constant 0 : index
    %12 = vector.load %arg8[%c0_7, %c0_8] : memref<16x128xf32, #tpu.memory_space<vmem>>, vector<16x128xf32>
    %13 = arith.truncf %11 : vector<16x256xf32> to vector<16x256xbf16>
    %c0_9 = arith.constant 0 : index
    %c0_10 = arith.constant 0 : index
    %14 = vector.load %arg5[%c0_9, %c0_10] : memref<256x128xbf16, #tpu.memory_space<vmem>>, vector<256x128xbf16>
    %cst_11 = arith.constant dense<0.000000e+00> : vector<16x128xf32>
    %15 = tpu.matmul %13, %14, %cst_11 {dimension_numbers = #tpu.dot_dimension_numbers<[1], [0], [0], [1], [0, 0, 1, 1], [], []>} : vector<16x256xbf16>, vector<256x128xbf16>, vector<16x128xf32> -> vector<16x128xf32>
    %16 = arith.addf %12, %15 : vector<16x128xf32>
    %c0_12 = arith.constant 0 : index
    %c0_13 = arith.constant 0 : index
    %17 = vector.load %arg8[%c0_12, %c0_13] : memref<16x128xf32, #tpu.memory_space<vmem>>, vector<16x128xf32>
    tpu.vector_store %arg8[%c0_12, %c0_13], %16 {strides = array<i32>} : memref<16x128xf32, #tpu.memory_space<vmem>>, vector<16x128xf32>,
    %c0_i32_14 = arith.constant 0 : i32
    %18 = arith.cmpi eq, %arg1, %c0_i32_14 : i32
    %19 = arith.extui %18 : i1 to i32
    %c0_i32_15 = arith.constant 0 : i32
    %20 = arith.cmpi ne, %19, %c0_i32_15 : i32
    scf.if %20 {
      %c0_16 = arith.constant 0 : index
      %c0_17 = arith.constant 0 : index
      %21 = vector.load %arg8[%c0_16, %c0_17] : memref<16x128xf32, #tpu.memory_space<vmem>>, vector<16x128xf32>
      %c0_18 = arith.constant 0 : index
      %c0_19 = arith.constant 0 : index
      %22 = vector.load %arg6[%c0_18, %c0_19] : memref<1x128xf32, #tpu.memory_space<vmem>>, vector<1x128xf32>
      %23 = vector.broadcast %22 : vector<1x128xf32> to vector<16x128xf32>
      %24 = arith.addf %21, %23 : vector<16x128xf32>
      %cst_20 = arith.constant dense<0xFF800000> : vector<16xf32>
      %25 = vector.multi_reduction <maximumf>, %24, %cst_20 [1] : vector<16x128xf32> to vector<16xf32>
      %26 = vector.shape_cast %25 : vector<16xf32> to vector<16x1xf32>
      %27 = vector.broadcast %26 : vector<16x1xf32> to vector<16x128xf32>
      %28 = arith.subf %24, %27 : vector<16x128xf32>
      %29 = math.exp %28 : vector<16x128xf32>
      %cst_21 = arith.constant dense<0.000000e+00> : vector<16xf32>
      %30 = vector.multi_reduction <add>, %29, %cst_21 [1] : vector<16x128xf32> to vector<16xf32>
      %31 = vector.shape_cast %30 : vector<16xf32> to vector<16x1xf32>
      %32 = math.log %31 : vector<16x1xf32>
      %33 = vector.broadcast %32 : vector<16x1xf32> to vector<16x128xf32>
      %34 = arith.subf %28, %33 : vector<16x128xf32>
      %c0_22 = arith.constant 0 : index
      %c0_23 = arith.constant 0 : index
      %35 = vector.load %arg7[%c0_22, %c0_23] : memref<16x128xf32, #tpu.memory_space<vmem>>, vector<16x128xf32>
      tpu.vector_store %arg7[%c0_22, %c0_23], %34 {strides = array<i32>} : memref<16x128xf32, #tpu.memory_space<vmem>>, vector<16x128xf32>,
    } else {
    }
    return
  }
  func.func @transform_0(%arg0: i32, %arg1: i32) -> (i32, i32) {
    %c0_i32 = arith.constant 0 : i32
    %c0_i32_0 = arith.constant 0 : i32
    return %arg0, %c0_i32 : i32, i32
  }
  func.func @transform_1(%arg0: i32, %arg1: i32) -> (i32, i32) {
    %c0_i32 = arith.constant 0 : i32
    %c0_i32_0 = arith.constant 0 : i32
    return %c0_i32, %arg1 : i32, i32
  }
  func.func @transform_2(%arg0: i32, %arg1: i32) -> (i32, i32) {
    %c0_i32 = arith.constant 0 : i32
    %c0_i32_0 = arith.constant 0 : i32
    return %c0_i32, %arg1 : i32, i32
  }
  func.func @transform_3(%arg0: i32, %arg1: i32) -> (i32, i32) {
    %c0_i32 = arith.constant 0 : i32
    %c0_i32_0 = arith.constant 0 : i32
    return %arg1, %c0_i32 : i32, i32
  }
  func.func @transform_4(%arg0: i32, %arg1: i32) -> (i32, i32) {
    %c0_i32 = arith.constant 0 : i32
    %c0_i32_0 = arith.constant 0 : i32
    %c0_i32_1 = arith.constant 0 : i32
    return %c0_i32, %c0_i32_0 : i32, i32
  }
  func.func @transform_5(%arg0: i32, %arg1: i32) -> (i32, i32) {
    %c0_i32 = arith.constant 0 : i32
    %c0_i32_0 = arith.constant 0 : i32
    return %arg0, %c0_i32 : i32, i32
  }
}

</mosaic_0001>

<llo_original>
// kernel: tpu_custom_call.1
$region0: #{tpu_custom_call.1}
  #allocation0 [shape = 'u32[]', space=smem, size = 0x4, offset = 0x4, fixed_abs, tag = 'smem constant byte address 0x4 - core index']
  #allocation1 [shape = 'u32[144,128]{1,0:T(1,128)}', space=vmem, size = 0x12000, scoped, tag = 'internal scratch']
  #allocation2 [shape = 'f32[16,128]{1,0:T(8,128)}', space=vmem, size = 0x2000, scoped, tag = 'scratch operand']
  %s0 = inlined_call_operand.hbm [shape: f32[16,2048], index: 0, kind: input, shape index: {}]
  %s1 = inlined_call_operand.hbm [shape: bf16[2048,256], index: 1, kind: input, shape index: {}]
  %s2 = inlined_call_operand.vmem [shape: f32[1,256], index: 2, kind: input, shape index: {}]
  %s3 = inlined_call_operand.hbm [shape: bf16[256,128], index: 3, kind: input, shape index: {}]
  %s4 = inlined_call_operand.vmem [shape: f32[1,128], index: 4, kind: input, shape index: {}]
  %s5 = inlined_call_operand.hbm [shape: f32[16,128], index: 5, kind: output, shape index: {}]
  %s6 = sld [smem:[#allocation0]]
  $region50: #{tpu_custom_call.1} parent=0
    _
  %s8 = ssub.s32 1, %s6
  %s9 = scalar_select 0, %s8, %s6
  $region1: #{tpu_custom_call.1} parent=0
    #allocation3 [shape = 'u8[131072]{0}', space=vmem, size = 0x20000, scoped, tag = 'input window, operand 0, single buffered']
    #allocation4 [shape = 's32[1]{0}', space=sflag, size = 0x4, scoped, tag = 'scoped memory for tpu_custom_call.1']
    #allocation5 [shape = 's32[1]{0}', space=sflag, size = 0x4, scoped, tag = 'scoped memory for tpu_custom_call.1']
    #allocation6 [shape = 'u8[1048576]{0}', space=vmem, size = 0x100000, scoped, tag = 'input window, operand 1, single buffered']
    #allocation7 [shape = 's32[1]{0}', space=sflag, size = 0x4, scoped, tag = 'scoped memory for tpu_custom_call.1']
    #allocation8 [shape = 'u8[65536]{0}', space=vmem, size = 0x10000, scoped, tag = 'input window, operand 3, single buffered']
    #allocation9 [shape = 'u8[8192]{0}', space=vmem, size = 0x2000, scoped, tag = 'output window, operand 0, single buffered']
    %10 = vsyncpa [#allocation4], 0
    %11 = vsyncpa [#allocation7], 0
    %12 = vsyncpa [#allocation5], 0
    // Predicated region
    $region2: #{tpu_custom_call.1} parent=1 // pred_check
      _
    $region3: #{tpu_custom_call.1} parent=1 // pred_check_branch
      %14 = sbr.rel (0) target = $region5
    $region4: #{tpu_custom_call.1} parent=1 // pred_region
      %s16 = ssub.s32 4096, 4096
      %17 = vsyncadd [#allocation4], %s16
      %s18 = sshll.u32 [#allocation3], 4
      %s19 = int_to_ptr.vmem [resolvable:$true] %s18
      %24 = dma.hbm_to_vmem [thread:$0]  %s0, 4096, %s19, [#allocation4], 2048, 2048, 128
    $region5: #{tpu_custom_call.1} parent=1 // pred_fallthru
      _
    // Predicated region
    $region6: #{tpu_custom_call.1} parent=1 // pred_check
      _
    $region7: #{tpu_custom_call.1} parent=1 // pred_check_branch
      %26 = sbr.rel (0) target = $region9
    $region8: #{tpu_custom_call.1} parent=1 // pred_region
      %s28 = ssub.s32 32768, 32768
      %29 = vsyncadd [#allocation7], %s28
      %s30 = sshll.u32 [#allocation6], 4
      %s31 = int_to_ptr.vmem [resolvable:$true] %s30
      %36 = dma.hbm_to_vmem [thread:$0]  %s1, 32768, %s31, [#allocation7], 128, 128, 8
    $region9: #{tpu_custom_call.1} parent=1 // pred_fallthru
      _
    // Predicated region
    $region10: #{tpu_custom_call.1} parent=1 // pred_check
      _
    $region11: #{tpu_custom_call.1} parent=1 // pred_check_branch
      %38 = sbr.rel (0) target = $region13
    $region12: #{tpu_custom_call.1} parent=1 // pred_region
      _
    $region13: #{tpu_custom_call.1} parent=1 // pred_fallthru
      _
    // Predicated region
    $region14: #{tpu_custom_call.1} parent=1 // pred_check
      _
    $region15: #{tpu_custom_call.1} parent=1 // pred_check_branch
      %40 = sbr.rel (0) target = $region17
    $region16: #{tpu_custom_call.1} parent=1 // pred_region
      %s42 = ssub.s32 2048, 2048
      %43 = vsyncadd [#allocation7], %s42
      %s44 = sshll.u32 [#allocation8], 4
      %s45 = int_to_ptr.vmem [resolvable:$true] %s44
      %50 = dma.hbm_to_vmem [thread:$0]  %s3, 2048, %s45, [#allocation7], 64, 64, 4
    $region17: #{tpu_custom_call.1} parent=1 // pred_fallthru
      _
    // Predicated region
    $region18: #{tpu_custom_call.1} parent=1 // pred_check
      _
    $region19: #{tpu_custom_call.1} parent=1 // pred_check_branch
      %52 = sbr.rel (0) target = $region21
    $region20: #{tpu_custom_call.1} parent=1 // pred_region
      _
    $region21: #{tpu_custom_call.1} parent=1 // pred_fallthru
      _
    // Predicated region
    $region22: #{tpu_custom_call.1} parent=1 // pred_check
      _
    $region23: #{tpu_custom_call.1} parent=1 // pred_check_branch
      %54 = sbr.rel (0) target = $region25
    $region24: #{tpu_custom_call.1} parent=1 // pred_region
      %55 = dma.done [#allocation4], 4096
    $region25: #{tpu_custom_call.1} parent=1 // pred_fallthru
      _
    // Predicated region
    $region26: #{tpu_custom_call.1} parent=1 // pred_check
      _
    $region27: #{tpu_custom_call.1} parent=1 // pred_check_branch
      %57 = sbr.rel (0) target = $region29
    $region28: #{tpu_custom_call.1} parent=1 // pred_region
      %58 = dma.done [#allocation7], 32768
    $region29: #{tpu_custom_call.1} parent=1 // pred_fallthru
      _
    // Predicated region
    $region30: #{tpu_custom_call.1} parent=1 // pred_check
      _
    $region31: #{tpu_custom_call.1} parent=1 // pred_check_branch
      %60 = sbr.rel (0) target = $region33
    $region32: #{tpu_custom_call.1} parent=1 // pred_region
      %61 = dma.done [#allocation7], 2048
    $region33: #{tpu_custom_call.1} parent=1 // pred_fallthru
      _
    %p63 = scmp.eq.s32.totalorder 0, 0
    // Predicated region
    $region34: #{tpu_custom_call.1} parent=1 // pred_check
      %p64 = pneg %p63
    $region35: #{tpu_custom_call.1} parent=1 // pred_check_branch
      %66 = sbr.rel (%p64) target = $region37
    $region36: #{tpu_custom_call.1} parent=1 // pred_region
      %67 = vst [vmem:[#allocation2] sm:$0xff] 0.0
      %68 = vst [vmem:[#allocation2 + $0x8] sm:$0xff] 0.0
    $region37: #{tpu_custom_call.1} parent=1 // pred_fallthru
      _
    %v69 = vld [vmem:[#allocation3] sm:$0xff]
    %v70 = vld [vmem:[#allocation3 + $0x8] sm:$0xff]
    %v71 = vld [vmem:[#allocation3 + $0x10] sm:$0xff]
    %v72 = vld [vmem:[#allocation3 + $0x18] sm:$0xff]
    %v73 = vld [vmem:[#allocation3 + $0x20] sm:$0xff]
    %v74 = vld [vmem:[#allocation3 + $0x28] sm:$0xff]
    %v75 = vld [vmem:[#allocation3 + $0x30] sm:$0xff]
    %v76 = vld [vmem:[#allocation3 + $0x38] sm:$0xff]
    %v77 = vld [vmem:[#allocation3 + $0x40] sm:$0xff]
    %v78 = vld [vmem:[#allocation3 + $0x48] sm:$0xff]
    %v79 = vld [vmem:[#allocation3 + $0x50] sm:$0xff]
    %v80 = vld [vmem:[#allocation3 + $0x58] sm:$0xff]
    %v81 = vld [vmem:[#allocation3 + $0x60] sm:$0xff]
    %v82 = vld [vmem:[#allocation3 + $0x68] sm:$0xff]
    %v83 = vld [vmem:[#allocation3 + $0x70] sm:$0xff]
    %v84 = vld [vmem:[#allocation3 + $0x78] sm:$0xff]
    %v85 = vld [vmem:[#allocation3 + $0x80] sm:$0xff]
    %v86 = vld [vmem:[#allocation3 + $0x88] sm:$0xff]
    %v87 = vld [vmem:[#allocation3 + $0x90] sm:$0xff]
    %v88 = vld [vmem:[#allocation3 + $0x98] sm:$0xff]
    %v89 = vld [vmem:[#allocation3 + $0xa0] sm:$0xff]
    %v90 = vld [vmem:[#allocation3 + $0xa8] sm:$0xff]
    %v91 = vld [vmem:[#allocation3 + $0xb0] sm:$0xff]
    %v92 = vld [vmem:[#allocation3 + $0xb8] sm:$0xff]
    %v93 = vld [vmem:[#allocation3 + $0xc0] sm:$0xff]
    %v94 = vld [vmem:[#allocation3 + $0xc8] sm:$0xff]
    %v95 = vld [vmem:[#allocation3 + $0xd0] sm:$0xff]
    %v96 = vld [vmem:[#allocation3 + $0xd8] sm:$0xff]
    %v97 = vld [vmem:[#allocation3 + $0xe0] sm:$0xff]
    %v98 = vld [vmem:[#allocation3 + $0xe8] sm:$0xff]
    %v99 = vld [vmem:[#allocation3 + $0xf0] sm:$0xff]
    %v100 = vld [vmem:[#allocation3 + $0xf8] sm:$0xff]
    %v101 = vpack.c.bf16 %v85, %v69
    %v102 = vpack.c.bf16 %v86, %v70
    %v103 = vpack.c.bf16 %v87, %v71
    %v104 = vpack.c.bf16 %v88, %v72
    %v105 = vpack.c.bf16 %v89, %v73
    %v106 = vpack.c.bf16 %v90, %v74
    %v107 = vpack.c.bf16 %v91, %v75
    %v108 = vpack.c.bf16 %v92, %v76
    %v109 = vpack.c.bf16 %v93, %v77
    %v110 = vpack.c.bf16 %v94, %v78
    %v111 = vpack.c.bf16 %v95, %v79
    %v112 = vpack.c.bf16 %v96, %v80
    %v113 = vpack.c.bf16 %v97, %v81
    %v114 = vpack.c.bf16 %v98, %v82
    %v115 = vpack.c.bf16 %v99, %v83
    %v116 = vpack.c.bf16 %v100, %v84
    %v117 = vld [vmem:[#allocation6] sm:$0xff]
    %v118 = vld [vmem:[#allocation6 + $0x8] sm:$0xff]
    %v119 = vld [vmem:[#allocation6 + $0x10] sm:$0xff]
    %v120 = vld [vmem:[#allocation6 + $0x18] sm:$0xff]
    %v121 = vld [vmem:[#allocation6 + $0x20] sm:$0xff]
    %v122 = vld [vmem:[#allocation6 + $0x28] sm:$0xff]
    %v123 = vld [vmem:[#allocation6 + $0x30] sm:$0xff]
    %v124 = vld [vmem:[#allocation6 + $0x38] sm:$0xff]
    %v125 = vld [vmem:[#allocation6 + $0x40] sm:$0xff]
    %v126 = vld [vmem:[#allocation6 + $0x48] sm:$0xff]
    %v127 = vld [vmem:[#allocation6 + $0x50] sm:$0xff]
    %v128 = vld [vmem:[#allocation6 + $0x58] sm:$0xff]
    %v129 = vld [vmem:[#allocation6 + $0x60] sm:$0xff]
    %v130 = vld [vmem:[#allocation6 + $0x68] sm:$0xff]
    %v131 = vld [vmem:[#allocation6 + $0x70] sm:$0xff]
    %v132 = vld [vmem:[#allocation6 + $0x78] sm:$0xff]
    %v133 = vld [vmem:[#allocation6 + $0x80] sm:$0xff]
    %v134 = vld [vmem:[#allocation6 + $0x88] sm:$0xff]
    %v135 = vld [vmem:[#allocation6 + $0x90] sm:$0xff]
    %v136 = vld [vmem:[#allocation6 + $0x98] sm:$0xff]
    %v137 = vld [vmem:[#allocation6 + $0xa0] sm:$0xff]
    %v138 = vld [vmem:[#allocation6 + $0xa8] sm:$0xff]
    %v139 = vld [vmem:[#allocation6 + $0xb0] sm:$0xff]
    %v140 = vld [vmem:[#allocation6 + $0xb8] sm:$0xff]
    %v141 = vld [vmem:[#allocation6 + $0xc0] sm:$0xff]
    %v142 = vld [vmem:[#allocation6 + $0xc8] sm:$0xff]
    %v143 = vld [vmem:[#allocation6 + $0xd0] sm:$0xff]
    %v144 = vld [vmem:[#allocation6 + $0xd8] sm:$0xff]
    %v145 = vld [vmem:[#allocation6 + $0xe0] sm:$0xff]
    %v146 = vld [vmem:[#allocation6 + $0xe8] sm:$0xff]
    %v147 = vld [vmem:[#allocation6 + $0xf0] sm:$0xff]
    %v148 = vld [vmem:[#allocation6 + $0xf8] sm:$0xff]
    %v149 = vld [vmem:[#allocation6 + $0x100] sm:$0xff]
    %v150 = vld [vmem:[#allocation6 + $0x108] sm:$0xff]
    %v151 = vld [vmem:[#allocation6 + $0x110] sm:$0xff]
    %v152 = vld [vmem:[#allocation6 + $0x118] sm:$0xff]
    %v153 = vld [vmem:[#allocation6 + $0x120] sm:$0xff]
    %v154 = vld [vmem:[#allocation6 + $0x128] sm:$0xff]
    %v155 = vld [vmem:[#allocation6 + $0x130] sm:$0xff]
    %v156 = vld [vmem:[#allocation6 + $0x138] sm:$0xff]
    %v157 = vld [vmem:[#allocation6 + $0x140] sm:$0xff]
    %v158 = vld [vmem:[#allocation6 + $0x148] sm:$0xff]
    %v159 = vld [vmem:[#allocation6 + $0x150] sm:$0xff]
    %v160 = vld [vmem:[#allocation6 + $0x158] sm:$0xff]
    %v161 = vld [vmem:[#allocation6 + $0x160] sm:$0xff]
    %v162 = vld [vmem:[#allocation6 + $0x168] sm:$0xff]
    %v163 = vld [vmem:[#allocation6 + $0x170] sm:$0xff]
    %v164 = vld [vmem:[#allocation6 + $0x178] sm:$0xff]
    %v165 = vld [vmem:[#allocation6 + $0x180] sm:$0xff]
    %v166 = vld [vmem:[#allocation6 + $0x188] sm:$0xff]
    %v167 = vld [vmem:[#allocation6 + $0x190] sm:$0xff]
    %v168 = vld [vmem:[#allocation6 + $0x198] sm:$0xff]
    %v169 = vld [vmem:[#allocation6 + $0x1a0] sm:$0xff]
    %v170 = vld [vmem:[#allocation6 + $0x1a8] sm:$0xff]
    %v171 = vld [vmem:[#allocation6 + $0x1b0] sm:$0xff]
    %v172 = vld [vmem:[#allocation6 + $0x1b8] sm:$0xff]
    %v173 = vld [vmem:[#allocation6 + $0x1c0] sm:$0xff]
    %v174 = vld [vmem:[#allocation6 + $0x1c8] sm:$0xff]
    %v175 = vld [vmem:[#allocation6 + $0x1d0] sm:$0xff]
    %v176 = vld [vmem:[#allocation6 + $0x1d8] sm:$0xff]
    %v177 = vld [vmem:[#allocation6 + $0x1e0] sm:$0xff]
    %v178 = vld [vmem:[#allocation6 + $0x1e8] sm:$0xff]
    %v179 = vld [vmem:[#allocation6 + $0x1f0] sm:$0xff]
    %v180 = vld [vmem:[#allocation6 + $0x1f8] sm:$0xff]
    %v181 = vld [vmem:[#allocation6 + $0x200] sm:$0xff]
    %v182 = vld [vmem:[#allocation6 + $0x208] sm:$0xff]
    %v183 = vld [vmem:[#allocation6 + $0x210] sm:$0xff]
    %v184 = vld [vmem:[#allocation6 + $0x218] sm:$0xff]
    %v185 = vld [vmem:[#allocation6 + $0x220] sm:$0xff]
    %v186 = vld [vmem:[#allocation6 + $0x228] sm:$0xff]
    %v187 = vld [vmem:[#allocation6 + $0x230] sm:$0xff]
    %v188 = vld [vmem:[#allocation6 + $0x238] sm:$0xff]
    %v189 = vld [vmem:[#allocation6 + $0x240] sm:$0xff]
    %v190 = vld [vmem:[#allocation6 + $0x248] sm:$0xff]
    %v191 = vld [vmem:[#allocation6 + $0x250] sm:$0xff]
    %v192 = vld [vmem:[#allocation6 + $0x258] sm:$0xff]
    %v193 = vld [vmem:[#allocation6 + $0x260] sm:$0xff]
    %v194 = vld [vmem:[#allocation6 + $0x268] sm:$0xff]
    %v195 = vld [vmem:[#allocation6 + $0x270] sm:$0xff]
    %v196 = vld [vmem:[#allocation6 + $0x278] sm:$0xff]
    %v197 = vld [vmem:[#allocation6 + $0x280] sm:$0xff]
    %v198 = vld [vmem:[#allocation6 + $0x288] sm:$0xff]
    %v199 = vld [vmem:[#allocation6 + $0x290] sm:$0xff]
    %v200 = vld [vmem:[#allocation6 + $0x298] sm:$0xff]
    %v201 = vld [vmem:[#allocation6 + $0x2a0] sm:$0xff]
    %v202 = vld [vmem:[#allocation6 + $0x2a8] sm:$0xff]
    %v203 = vld [vmem:[#allocation6 + $0x2b0] sm:$0xff]
    %v204 = vld [vmem:[#allocation6 + $0x2b8] sm:$0xff]
    %v205 = vld [vmem:[#allocation6 + $0x2c0] sm:$0xff]
    %v206 = vld [vmem:[#allocation6 + $0x2c8] sm:$0xff]
    %v207 = vld [vmem:[#allocation6 + $0x2d0] sm:$0xff]
    %v208 = vld [vmem:[#allocation6 + $0x2d8] sm:$0xff]
    %v209 = vld [vmem:[#allocation6 + $0x2e0] sm:$0xff]
    %v210 = vld [vmem:[#allocation6 + $0x2e8] sm:$0xff]
    %v211 = vld [vmem:[#allocation6 + $0x2f0] sm:$0xff]
    %v212 = vld [vmem:[#allocation6 + $0x2f8] sm:$0xff]
    %v213 = vld [vmem:[#allocation6 + $0x300] sm:$0xff]
    %v214 = vld [vmem:[#allocation6 + $0x308] sm:$0xff]
    %v215 = vld [vmem:[#allocation6 + $0x310] sm:$0xff]
    %v216 = vld [vmem:[#allocation6 + $0x318] sm:$0xff]
    %v217 = vld [vmem:[#allocation6 + $0x320] sm:$0xff]
    %v218 = vld [vmem:[#allocation6 + $0x328] sm:$0xff]
    %v219 = vld [vmem:[#allocation6 + $0x330] sm:$0xff]
    %v220 = vld [vmem:[#allocation6 + $0x338] sm:$0xff]
    %v221 = vld [vmem:[#allocation6 + $0x340] sm:$0xff]
    %v222 = vld [vmem:[#allocation6 + $0x348] sm:$0xff]
    %v223 = vld [vmem:[#allocation6 + $0x350] sm:$0xff]
    %v224 = vld [vmem:[#allocation6 + $0x358] sm:$0xff]
    %v225 = vld [vmem:[#allocation6 + $0x360] sm:$0xff]
    %v226 = vld [vmem:[#allocation6 + $0x368] sm:$0xff]
    %v227 = vld [vmem:[#allocation6 + $0x370] sm:$0xff]
    %v228 = vld [vmem:[#allocation6 + $0x378] sm:$0xff]
    %v229 = vld [vmem:[#allocation6 + $0x380] sm:$0xff]
    %v230 = vld [vmem:[#allocation6 + $0x388] sm:$0xff]
    %v231 = vld [vmem:[#allocation6 + $0x390] sm:$0xff]
    %v232 = vld [vmem:[#allocation6 + $0x398] sm:$0xff]
    %v233 = vld [vmem:[#allocation6 + $0x3a0] sm:$0xff]
    %v234 = vld [vmem:[#allocation6 + $0x3a8] sm:$0xff]
    %v235 = vld [vmem:[#allocation6 + $0x3b0] sm:$0xff]
    %v236 = vld [vmem:[#allocation6 + $0x3b8] sm:$0xff]
    %v237 = vld [vmem:[#allocation6 + $0x3c0] sm:$0xff]
    %v238 = vld [vmem:[#allocation6 + $0x3c8] sm:$0xff]
    %v239 = vld [vmem:[#allocation6 + $0x3d0] sm:$0xff]
    %v240 = vld [vmem:[#allocation6 + $0x3d8] sm:$0xff]
    %v241 = vld [vmem:[#allocation6 + $0x3e0] sm:$0xff]
    %v242 = vld [vmem:[#allocation6 + $0x3e8] sm:$0xff]
    %v243 = vld [vmem:[#allocation6 + $0x3f0] sm:$0xff]
    %v244 = vld [vmem:[#allocation6 + $0x3f8] sm:$0xff]
    %v245 = vld [vmem:[#allocation6 + $0x400] sm:$0xff]
    %v246 = vld [vmem:[#allocation6 + $0x408] sm:$0xff]
    %v247 = vld [vmem:[#allocation6 + $0x410] sm:$0xff]
    %v248 = vld [vmem:[#allocation6 + $0x418] sm:$0xff]
    %v249 = vld [vmem:[#allocation6 + $0x420] sm:$0xff]
    %v250 = vld [vmem:[#allocation6 + $0x428] sm:$0xff]
    %v251 = vld [vmem:[#allocation6 + $0x430] sm:$0xff]
    %v252 = vld [vmem:[#allocation6 + $0x438] sm:$0xff]
    %v253 = vld [vmem:[#allocation6 + $0x440] sm:$0xff]
    %v254 = vld [vmem:[#allocation6 + $0x448] sm:$0xff]
    %v255 = vld [vmem:[#allocation6 + $0x450] sm:$0xff]
    %v256 = vld [vmem:[#allocation6 + $0x458] sm:$0xff]
    %v257 = vld [vmem:[#allocation6 + $0x460] sm:$0xff]
    %v258 = vld [vmem:[#allocation6 + $0x468] sm:$0xff]
    %v259 = vld [vmem:[#allocation6 + $0x470] sm:$0xff]
    %v260 = vld [vmem:[#allocation6 + $0x478] sm:$0xff]
    %v261 = vld [vmem:[#allocation6 + $0x480] sm:$0xff]
    %v262 = vld [vmem:[#allocation6 + $0x488] sm:$0xff]
    %v263 = vld [vmem:[#allocation6 + $0x490] sm:$0xff]
    %v264 = vld [vmem:[#allocation6 + $0x498] sm:$0xff]
    %v265 = vld [vmem:[#allocation6 + $0x4a0] sm:$0xff]
    %v266 = vld [vmem:[#allocation6 + $0x4a8] sm:$0xff]
    %v267 = vld [vmem:[#allocation6 + $0x4b0] sm:$0xff]
    %v268 = vld [vmem:[#allocation6 + $0x4b8] sm:$0xff]
    %v269 = vld [vmem:[#allocation6 + $0x4c0] sm:$0xff]
    %v270 = vld [vmem:[#allocation6 + $0x4c8] sm:$0xff]
    %v271 = vld [vmem:[#allocation6 + $0x4d0] sm:$0xff]
    %v272 = vld [vmem:[#allocation6 + $0x4d8] sm:$0xff]
    %v273 = vld [vmem:[#allocation6 + $0x4e0] sm:$0xff]
    %v274 = vld [vmem:[#allocation6 + $0x4e8] sm:$0xff]
    %v275 = vld [vmem:[#allocation6 + $0x4f0] sm:$0xff]
    %v276 = vld [vmem:[#allocation6 + $0x4f8] sm:$0xff]
    %v277 = vld [vmem:[#allocation6 + $0x500] sm:$0xff]
    %v278 = vld [vmem:[#allocation6 + $0x508] sm:$0xff]
    %v279 = vld [vmem:[#allocation6 + $0x510] sm:$0xff]
    %v280 = vld [vmem:[#allocation6 + $0x518] sm:$0xff]
    %v281 = vld [vmem:[#allocation6 + $0x520] sm:$0xff]
    %v282 = vld [vmem:[#allocation6 + $0x528] sm:$0xff]
    %v283 = vld [vmem:[#allocation6 + $0x530] sm:$0xff]
    %v284 = vld [vmem:[#allocation6 + $0x538] sm:$0xff]
    %v285 = vld [vmem:[#allocation6 + $0x540] sm:$0xff]
    %v286 = vld [vmem:[#allocation6 + $0x548] sm:$0xff]
    %v287 = vld [vmem:[#allocation6 + $0x550] sm:$0xff]
    %v288 = vld [vmem:[#allocation6 + $0x558] sm:$0xff]
    %v289 = vld [vmem:[#allocation6 + $0x560] sm:$0xff]
    %v290 = vld [vmem:[#allocation6 + $0x568] sm:$0xff]
    %v291 = vld [vmem:[#allocation6 + $0x570] sm:$0xff]
    %v292 = vld [vmem:[#allocation6 + $0x578] sm:$0xff]
    %v293 = vld [vmem:[#allocation6 + $0x580] sm:$0xff]
    %v294 = vld [vmem:[#allocation6 + $0x588] sm:$0xff]
    %v295 = vld [vmem:[#allocation6 + $0x590] sm:$0xff]
    %v296 = vld [vmem:[#allocation6 + $0x598] sm:$0xff]
    %v297 = vld [vmem:[#allocation6 + $0x5a0] sm:$0xff]
    %v298 = vld [vmem:[#allocation6 + $0x5a8] sm:$0xff]
    %v299 = vld [vmem:[#allocation6 + $0x5b0] sm:$0xff]
    %v300 = vld [vmem:[#allocation6 + $0x5b8] sm:$0xff]
    %v301 = vld [vmem:[#allocation6 + $0x5c0] sm:$0xff]
    %v302 = vld [vmem:[#allocation6 + $0x5c8] sm:$0xff]
    %v303 = vld [vmem:[#allocation6 + $0x5d0] sm:$0xff]
    %v304 = vld [vmem:[#allocation6 + $0x5d8] sm:$0xff]
    %v305 = vld [vmem:[#allocation6 + $0x5e0] sm:$0xff]
    %v306 = vld [vmem:[#allocation6 + $0x5e8] sm:$0xff]
    %v307 = vld [vmem:[#allocation6 + $0x5f0] sm:$0xff]
    %v308 = vld [vmem:[#allocation6 + $0x5f8] sm:$0xff]
    %v309 = vld [vmem:[#allocation6 + $0x600] sm:$0xff]
    %v310 = vld [vmem:[#allocation6 + $0x608] sm:$0xff]
    %v311 = vld [vmem:[#allocation6 + $0x610] sm:$0xff]
    %v312 = vld [vmem:[#allocation6 + $0x618] sm:$0xff]
    %v313 = vld [vmem:[#allocation6 + $0x620] sm:$0xff]
    %v314 = vld [vmem:[#allocation6 + $0x628] sm:$0xff]
    %v315 = vld [vmem:[#allocation6 + $0x630] sm:$0xff]
    %v316 = vld [vmem:[#allocation6 + $0x638] sm:$0xff]
    %v317 = vld [vmem:[#allocation6 + $0x640] sm:$0xff]
    %v318 = vld [vmem:[#allocation6 + $0x648] sm:$0xff]
    %v319 = vld [vmem:[#allocation6 + $0x650] sm:$0xff]
    %v320 = vld [vmem:[#allocation6 + $0x658] sm:$0xff]
    %v321 = vld [vmem:[#allocation6 + $0x660] sm:$0xff]
    %v322 = vld [vmem:[#allocation6 + $0x668] sm:$0xff]
    %v323 = vld [vmem:[#allocation6 + $0x670] sm:$0xff]
    %v324 = vld [vmem:[#allocation6 + $0x678] sm:$0xff]
    %v325 = vld [vmem:[#allocation6 + $0x680] sm:$0xff]
    %v326 = vld [vmem:[#allocation6 + $0x688] sm:$0xff]
    %v327 = vld [vmem:[#allocation6 + $0x690] sm:$0xff]
    %v328 = vld [vmem:[#allocation6 + $0x698] sm:$0xff]
    %v329 = vld [vmem:[#allocation6 + $0x6a0] sm:$0xff]
    %v330 = vld [vmem:[#allocation6 + $0x6a8] sm:$0xff]
    %v331 = vld [vmem:[#allocation6 + $0x6b0] sm:$0xff]
    %v332 = vld [vmem:[#allocation6 + $0x6b8] sm:$0xff]
    %v333 = vld [vmem:[#allocation6 + $0x6c0] sm:$0xff]
    %v334 = vld [vmem:[#allocation6 + $0x6c8] sm:$0xff]
    %v335 = vld [vmem:[#allocation6 + $0x6d0] sm:$0xff]
    %v336 = vld [vmem:[#allocation6 + $0x6d8] sm:$0xff]
    %v337 = vld [vmem:[#allocation6 + $0x6e0] sm:$0xff]
    %v338 = vld [vmem:[#allocation6 + $0x6e8] sm:$0xff]
    %v339 = vld [vmem:[#allocation6 + $0x6f0] sm:$0xff]
    %v340 = vld [vmem:[#allocation6 + $0x6f8] sm:$0xff]
    %v341 = vld [vmem:[#allocation6 + $0x700] sm:$0xff]
    %v342 = vld [vmem:[#allocation6 + $0x708] sm:$0xff]
    %v343 = vld [vmem:[#allocation6 + $0x710] sm:$0xff]
    %v344 = vld [vmem:[#allocation6 + $0x718] sm:$0xff]
    %v345 = vld [vmem:[#allocation6 + $0x720] sm:$0xff]
    %v346 = vld [vmem:[#allocation6 + $0x728] sm:$0xff]
    %v347 = vld [vmem:[#allocation6 + $0x730] sm:$0xff]
    %v348 = vld [vmem:[#allocation6 + $0x738] sm:$0xff]
    %v349 = vld [vmem:[#allocation6 + $0x740] sm:$0xff]
    %v350 = vld [vmem:[#allocation6 + $0x748] sm:$0xff]
    %v351 = vld [vmem:[#allocation6 + $0x750] sm:$0xff]
    %v352 = vld [vmem:[#allocation6 + $0x758] sm:$0xff]
    %v353 = vld [vmem:[#allocation6 + $0x760] sm:$0xff]
    %v354 = vld [vmem:[#allocation6 + $0x768] sm:$0xff]
    %v355 = vld [vmem:[#allocation6 + $0x770] sm:$0xff]
    %v356 = vld [vmem:[#allocation6 + $0x778] sm:$0xff]
    %v357 = vld [vmem:[#allocation6 + $0x780] sm:$0xff]
    %v358 = vld [vmem:[#allocation6 + $0x788] sm:$0xff]
    %v359 = vld [vmem:[#allocation6 + $0x790] sm:$0xff]
    %v360 = vld [vmem:[#allocation6 + $0x798] sm:$0xff]
    %v361 = vld [vmem:[#allocation6 + $0x7a0] sm:$0xff]
    %v362 = vld [vmem:[#allocation6 + $0x7a8] sm:$0xff]
    %v363 = vld [vmem:[#allocation6 + $0x7b0] sm:$0xff]
    %v364 = vld [vmem:[#allocation6 + $0x7b8] sm:$0xff]
    %v365 = vld [vmem:[#allocation6 + $0x7c0] sm:$0xff]
    %v366 = vld [vmem:[#allocation6 + $0x7c8] sm:$0xff]
    %v367 = vld [vmem:[#allocation6 + $0x7d0] sm:$0xff]
    %v368 = vld [vmem:[#allocation6 + $0x7d8] sm:$0xff]
    %v369 = vld [vmem:[#allocation6 + $0x7e0] sm:$0xff]
    %v370 = vld [vmem:[#allocation6 + $0x7e8] sm:$0xff]
    %v371 = vld [vmem:[#allocation6 + $0x7f0] sm:$0xff]
    %v372 = vld [vmem:[#allocation6 + $0x7f8] sm:$0xff]
    %v373 = vld [vmem:[%s2] sm:$0x3]
    %v375 = vlaneseq
    %v376 = vshrl.u32 %v375, 7
    %v377 = vsub.s32 0, %v376
    %v378 = vrot.slane %v373, %v377
    %v379 = vlaneseq
    %v380 = vshrl.u32 %v379, 7
    %v381 = vsub.s32 1, %v380
    %v382 = vrot.slane %v373, %v381
    %v641 = vunpack.c.l.b16 %v117
    %v642 = vunpack.c.h.b16 %v117
    %v643 = vunpack.c.l.b16 %v118
    %v644 = vunpack.c.h.b16 %v118
    %v645 = vunpack.c.l.b16 %v119
    %v646 = vunpack.c.h.b16 %v119
    %v647 = vunpack.c.l.b16 %v120
    %v648 = vunpack.c.h.b16 %v120
    %v649 = vunpack.c.l.b16 %v121
    %v650 = vunpack.c.h.b16 %v121
    %v651 = vunpack.c.l.b16 %v122
    %v652 = vunpack.c.h.b16 %v122
    %v653 = vunpack.c.l.b16 %v123
    %v654 = vunpack.c.h.b16 %v123
    %v655 = vunpack.c.l.b16 %v124
    %v656 = vunpack.c.h.b16 %v124
    %v657 = vunpack.c.l.b16 %v125
    %v658 = vunpack.c.h.b16 %v125
    %v659 = vunpack.c.l.b16 %v126
    %v660 = vunpack.c.h.b16 %v126
    %v661 = vunpack.c.l.b16 %v127
    %v662 = vunpack.c.h.b16 %v127
    %v663 = vunpack.c.l.b16 %v128
    %v664 = vunpack.c.h.b16 %v128
    %v665 = vunpack.c.l.b16 %v129
    %v666 = vunpack.c.h.b16 %v129
    %v667 = vunpack.c.l.b16 %v130
    %v668 = vunpack.c.h.b16 %v130
    %v669 = vunpack.c.l.b16 %v131
    %v670 = vunpack.c.h.b16 %v131
    %v671 = vunpack.c.l.b16 %v132
    %v672 = vunpack.c.h.b16 %v132
    %v673 = vunpack.c.l.b16 %v133
    %v674 = vunpack.c.h.b16 %v133
    %v675 = vunpack.c.l.b16 %v134
    %v676 = vunpack.c.h.b16 %v134
    %v677 = vunpack.c.l.b16 %v135
    %v678 = vunpack.c.h.b16 %v135
    %v679 = vunpack.c.l.b16 %v136
    %v680 = vunpack.c.h.b16 %v136
    %v681 = vunpack.c.l.b16 %v137
    %v682 = vunpack.c.h.b16 %v137
    %v683 = vunpack.c.l.b16 %v138
    %v684 = vunpack.c.h.b16 %v138
    %v685 = vunpack.c.l.b16 %v139
    %v686 = vunpack.c.h.b16 %v139
    %v687 = vunpack.c.l.b16 %v140
    %v688 = vunpack.c.h.b16 %v140
    %v689 = vunpack.c.l.b16 %v141
    %v690 = vunpack.c.h.b16 %v141
    %v691 = vunpack.c.l.b16 %v142
    %v692 = vunpack.c.h.b16 %v142
    %v693 = vunpack.c.l.b16 %v143
    %v694 = vunpack.c.h.b16 %v143
    %v695 = vunpack.c.l.b16 %v144
    %v696 = vunpack.c.h.b16 %v144
    %v697 = vunpack.c.l.b16 %v145
    %v698 = vunpack.c.h.b16 %v145
    %v699 = vunpack.c.l.b16 %v146
    %v700 = vunpack.c.h.b16 %v146
    %v701 = vunpack.c.l.b16 %v147
    %v702 = vunpack.c.h.b16 %v147
    %v703 = vunpack.c.l.b16 %v148
    %v704 = vunpack.c.h.b16 %v148
    %v705 = vunpack.c.l.b16 %v149
    %v706 = vunpack.c.h.b16 %v149
    %v707 = vunpack.c.l.b16 %v150
    %v708 = vunpack.c.h.b16 %v150
    %v709 = vunpack.c.l.b16 %v151
    %v710 = vunpack.c.h.b16 %v151
    %v711 = vunpack.c.l.b16 %v152
    %v712 = vunpack.c.h.b16 %v152
    %v713 = vunpack.c.l.b16 %v153
    %v714 = vunpack.c.h.b16 %v153
    %v715 = vunpack.c.l.b16 %v154
    %v716 = vunpack.c.h.b16 %v154
    %v717 = vunpack.c.l.b16 %v155
    %v718 = vunpack.c.h.b16 %v155
    %v719 = vunpack.c.l.b16 %v156
    %v720 = vunpack.c.h.b16 %v156
    %v721 = vunpack.c.l.b16 %v157
    %v722 = vunpack.c.h.b16 %v157
    %v723 = vunpack.c.l.b16 %v158
    %v724 = vunpack.c.h.b16 %v158
    %v725 = vunpack.c.l.b16 %v159
    %v726 = vunpack.c.h.b16 %v159
    %v727 = vunpack.c.l.b16 %v160
    %v728 = vunpack.c.h.b16 %v160
    %v729 = vunpack.c.l.b16 %v161
    %v730 = vunpack.c.h.b16 %v161
    %v731 = vunpack.c.l.b16 %v162
    %v732 = vunpack.c.h.b16 %v162
    %v733 = vunpack.c.l.b16 %v163
    %v734 = vunpack.c.h.b16 %v163
    %v735 = vunpack.c.l.b16 %v164
    %v736 = vunpack.c.h.b16 %v164
    %v737 = vunpack.c.l.b16 %v165
    %v738 = vunpack.c.h.b16 %v165
    %v739 = vunpack.c.l.b16 %v166
    %v740 = vunpack.c.h.b16 %v166
    %v741 = vunpack.c.l.b16 %v167
    %v742 = vunpack.c.h.b16 %v167
    %v743 = vunpack.c.l.b16 %v168
    %v744 = vunpack.c.h.b16 %v168
    %v745 = vunpack.c.l.b16 %v169
    %v746 = vunpack.c.h.b16 %v169
    %v747 = vunpack.c.l.b16 %v170
    %v748 = vunpack.c.h.b16 %v170
    %v749 = vunpack.c.l.b16 %v171
    %v750 = vunpack.c.h.b16 %v171
    %v751 = vunpack.c.l.b16 %v172
    %v752 = vunpack.c.h.b16 %v172
    %v753 = vunpack.c.l.b16 %v173
    %v754 = vunpack.c.h.b16 %v173
    %v755 = vunpack.c.l.b16 %v174
    %v756 = vunpack.c.h.b16 %v174
    %v757 = vunpack.c.l.b16 %v175
    %v758 = vunpack.c.h.b16 %v175
    %v759 = vunpack.c.l.b16 %v176
    %v760 = vunpack.c.h.b16 %v176
    %v761 = vunpack.c.l.b16 %v177
    %v762 = vunpack.c.h.b16 %v177
    %v763 = vunpack.c.l.b16 %v178
    %v764 = vunpack.c.h.b16 %v178
    %v765 = vunpack.c.l.b16 %v179
    %v766 = vunpack.c.h.b16 %v179
    %v767 = vunpack.c.l.b16 %v180
    %v768 = vunpack.c.h.b16 %v180
    %v769 = vunpack.c.l.b16 %v181
    %v770 = vunpack.c.h.b16 %v181
    %v771 = vunpack.c.l.b16 %v182
    %v772 = vunpack.c.h.b16 %v182
    %v773 = vunpack.c.l.b16 %v183
    %v774 = vunpack.c.h.b16 %v183
    %v775 = vunpack.c.l.b16 %v184
    %v776 = vunpack.c.h.b16 %v184
    %v777 = vunpack.c.l.b16 %v185
    %v778 = vunpack.c.h.b16 %v185
    %v779 = vunpack.c.l.b16 %v186
    %v780 = vunpack.c.h.b16 %v186
    %v781 = vunpack.c.l.b16 %v187
    %v782 = vunpack.c.h.b16 %v187
    %v783 = vunpack.c.l.b16 %v188
    %v784 = vunpack.c.h.b16 %v188
    %v785 = vunpack.c.l.b16 %v189
    %v786 = vunpack.c.h.b16 %v189
    %v787 = vunpack.c.l.b16 %v190
    %v788 = vunpack.c.h.b16 %v190
    %v789 = vunpack.c.l.b16 %v191
    %v790 = vunpack.c.h.b16 %v191
    %v791 = vunpack.c.l.b16 %v192
    %v792 = vunpack.c.h.b16 %v192
    %v793 = vunpack.c.l.b16 %v193
    %v794 = vunpack.c.h.b16 %v193
    %v795 = vunpack.c.l.b16 %v194
    %v796 = vunpack.c.h.b16 %v194
    %v797 = vunpack.c.l.b16 %v195
    %v798 = vunpack.c.h.b16 %v195
    %v799 = vunpack.c.l.b16 %v196
    %v800 = vunpack.c.h.b16 %v196
    %v801 = vunpack.c.l.b16 %v197
    %v802 = vunpack.c.h.b16 %v197
    %v803 = vunpack.c.l.b16 %v198
    %v804 = vunpack.c.h.b16 %v198
    %v805 = vunpack.c.l.b16 %v199
    %v806 = vunpack.c.h.b16 %v199
    %v807 = vunpack.c.l.b16 %v200
    %v808 = vunpack.c.h.b16 %v200
    %v809 = vunpack.c.l.b16 %v201
    %v810 = vunpack.c.h.b16 %v201
    %v811 = vunpack.c.l.b16 %v202
    %v812 = vunpack.c.h.b16 %v202
    %v813 = vunpack.c.l.b16 %v203
    %v814 = vunpack.c.h.b16 %v203
    %v815 = vunpack.c.l.b16 %v204
    %v816 = vunpack.c.h.b16 %v204
    %v817 = vunpack.c.l.b16 %v205
    %v818 = vunpack.c.h.b16 %v205
    %v819 = vunpack.c.l.b16 %v206
    %v820 = vunpack.c.h.b16 %v206
    %v821 = vunpack.c.l.b16 %v207
    %v822 = vunpack.c.h.b16 %v207
    %v823 = vunpack.c.l.b16 %v208
    %v824 = vunpack.c.h.b16 %v208
    %v825 = vunpack.c.l.b16 %v209
    %v826 = vunpack.c.h.b16 %v209
    %v827 = vunpack.c.l.b16 %v210
    %v828 = vunpack.c.h.b16 %v210
    %v829 = vunpack.c.l.b16 %v211
    %v830 = vunpack.c.h.b16 %v211
    %v831 = vunpack.c.l.b16 %v212
    %v832 = vunpack.c.h.b16 %v212
    %v833 = vunpack.c.l.b16 %v213
    %v834 = vunpack.c.h.b16 %v213
    %v835 = vunpack.c.l.b16 %v214
    %v836 = vunpack.c.h.b16 %v214
    %v837 = vunpack.c.l.b16 %v215
    %v838 = vunpack.c.h.b16 %v215
    %v839 = vunpack.c.l.b16 %v216
    %v840 = vunpack.c.h.b16 %v216
    %v841 = vunpack.c.l.b16 %v217
    %v842 = vunpack.c.h.b16 %v217
    %v843 = vunpack.c.l.b16 %v218
    %v844 = vunpack.c.h.b16 %v218
    %v845 = vunpack.c.l.b16 %v219
    %v846 = vunpack.c.h.b16 %v219
    %v847 = vunpack.c.l.b16 %v220
    %v848 = vunpack.c.h.b16 %v220
    %v849 = vunpack.c.l.b16 %v221
    %v850 = vunpack.c.h.b16 %v221
    %v851 = vunpack.c.l.b16 %v222
    %v852 = vunpack.c.h.b16 %v222
    %v853 = vunpack.c.l.b16 %v223
    %v854 = vunpack.c.h.b16 %v223
    %v855 = vunpack.c.l.b16 %v224
    %v856 = vunpack.c.h.b16 %v224
    %v857 = vunpack.c.l.b16 %v225
    %v858 = vunpack.c.h.b16 %v225
    %v859 = vunpack.c.l.b16 %v226
    %v860 = vunpack.c.h.b16 %v226
    %v861 = vunpack.c.l.b16 %v227
    %v862 = vunpack.c.h.b16 %v227
    %v863 = vunpack.c.l.b16 %v228
    %v864 = vunpack.c.h.b16 %v228
    %v865 = vunpack.c.l.b16 %v229
    %v866 = vunpack.c.h.b16 %v229
    %v867 = vunpack.c.l.b16 %v230
    %v868 = vunpack.c.h.b16 %v230
    %v869 = vunpack.c.l.b16 %v231
    %v870 = vunpack.c.h.b16 %v231
    %v871 = vunpack.c.l.b16 %v232
    %v872 = vunpack.c.h.b16 %v232
    %v873 = vunpack.c.l.b16 %v233
    %v874 = vunpack.c.h.b16 %v233
    %v875 = vunpack.c.l.b16 %v234
    %v876 = vunpack.c.h.b16 %v234
    %v877 = vunpack.c.l.b16 %v235
    %v878 = vunpack.c.h.b16 %v235
    %v879 = vunpack.c.l.b16 %v236
    %v880 = vunpack.c.h.b16 %v236
    %v881 = vunpack.c.l.b16 %v237
    %v882 = vunpack.c.h.b16 %v237
    %v883 = vunpack.c.l.b16 %v238
    %v884 = vunpack.c.h.b16 %v238
    %v885 = vunpack.c.l.b16 %v239
    %v886 = vunpack.c.h.b16 %v239
    %v887 = vunpack.c.l.b16 %v240
    %v888 = vunpack.c.h.b16 %v240
    %v889 = vunpack.c.l.b16 %v241
    %v890 = vunpack.c.h.b16 %v241
    %v891 = vunpack.c.l.b16 %v242
    %v892 = vunpack.c.h.b16 %v242
    %v893 = vunpack.c.l.b16 %v243
    %v894 = vunpack.c.h.b16 %v243
    %v895 = vunpack.c.l.b16 %v244
    %v896 = vunpack.c.h.b16 %v244
    %v897 = vunpack.c.l.b16 %v245
    %v898 = vunpack.c.h.b16 %v245
    %v899 = vunpack.c.l.b16 %v246
    %v900 = vunpack.c.h.b16 %v246
    %v901 = vunpack.c.l.b16 %v247
    %v902 = vunpack.c.h.b16 %v247
    %v903 = vunpack.c.l.b16 %v248
    %v904 = vunpack.c.h.b16 %v248
    %v905 = vunpack.c.l.b16 %v249
    %v906 = vunpack.c.h.b16 %v249
    %v907 = vunpack.c.l.b16 %v250
    %v908 = vunpack.c.h.b16 %v250
    %v909 = vunpack.c.l.b16 %v251
    %v910 = vunpack.c.h.b16 %v251
    %v911 = vunpack.c.l.b16 %v252
    %v912 = vunpack.c.h.b16 %v252
    %v913 = vunpack.c.l.b16 %v253
    %v914 = vunpack.c.h.b16 %v253
    %v915 = vunpack.c.l.b16 %v254
    %v916 = vunpack.c.h.b16 %v254
    %v917 = vunpack.c.l.b16 %v255
    %v918 = vunpack.c.h.b16 %v255
    %v919 = vunpack.c.l.b16 %v256
    %v920 = vunpack.c.h.b16 %v256
    %v921 = vunpack.c.l.b16 %v257
    %v922 = vunpack.c.h.b16 %v257
    %v923 = vunpack.c.l.b16 %v258
    %v924 = vunpack.c.h.b16 %v258
    %v925 = vunpack.c.l.b16 %v259
    %v926 = vunpack.c.h.b16 %v259
    %v927 = vunpack.c.l.b16 %v260
    %v928 = vunpack.c.h.b16 %v260
    %v929 = vunpack.c.l.b16 %v261
    %v930 = vunpack.c.h.b16 %v261
    %v931 = vunpack.c.l.b16 %v262
    %v932 = vunpack.c.h.b16 %v262
    %v933 = vunpack.c.l.b16 %v263
    %v934 = vunpack.c.h.b16 %v263
    %v935 = vunpack.c.l.b16 %v264
    %v936 = vunpack.c.h.b16 %v264
    %v937 = vunpack.c.l.b16 %v265
    %v938 = vunpack.c.h.b16 %v265
    %v939 = vunpack.c.l.b16 %v266
    %v940 = vunpack.c.h.b16 %v266
    %v941 = vunpack.c.l.b16 %v267
    %v942 = vunpack.c.h.b16 %v267
    %v943 = vunpack.c.l.b16 %v268
    %v944 = vunpack.c.h.b16 %v268
    %v945 = vunpack.c.l.b16 %v269
    %v946 = vunpack.c.h.b16 %v269
    %v947 = vunpack.c.l.b16 %v270
    %v948 = vunpack.c.h.b16 %v270
    %v949 = vunpack.c.l.b16 %v271
    %v950 = vunpack.c.h.b16 %v271
    %v951 = vunpack.c.l.b16 %v272
    %v952 = vunpack.c.h.b16 %v272
    %v953 = vunpack.c.l.b16 %v273
    %v954 = vunpack.c.h.b16 %v273
    %v955 = vunpack.c.l.b16 %v274
    %v956 = vunpack.c.h.b16 %v274
    %v957 = vunpack.c.l.b16 %v275
    %v958 = vunpack.c.h.b16 %v275
    %v959 = vunpack.c.l.b16 %v276
    %v960 = vunpack.c.h.b16 %v276
    %v961 = vunpack.c.l.b16 %v277
    %v962 = vunpack.c.h.b16 %v277
    %v963 = vunpack.c.l.b16 %v278
    %v964 = vunpack.c.h.b16 %v278
    %v965 = vunpack.c.l.b16 %v279
    %v966 = vunpack.c.h.b16 %v279
    %v967 = vunpack.c.l.b16 %v280
    %v968 = vunpack.c.h.b16 %v280
    %v969 = vunpack.c.l.b16 %v281
    %v970 = vunpack.c.h.b16 %v281
    %v971 = vunpack.c.l.b16 %v282
    %v972 = vunpack.c.h.b16 %v282
    %v973 = vunpack.c.l.b16 %v283
    %v974 = vunpack.c.h.b16 %v283
    %v975 = vunpack.c.l.b16 %v284
    %v976 = vunpack.c.h.b16 %v284
    %v977 = vunpack.c.l.b16 %v285
    %v978 = vunpack.c.h.b16 %v285
    %v979 = vunpack.c.l.b16 %v286
    %v980 = vunpack.c.h.b16 %v286
    %v981 = vunpack.c.l.b16 %v287
    %v982 = vunpack.c.h.b16 %v287
    %v983 = vunpack.c.l.b16 %v288
    %v984 = vunpack.c.h.b16 %v288
    %v985 = vunpack.c.l.b16 %v289
    %v986 = vunpack.c.h.b16 %v289
    %v987 = vunpack.c.l.b16 %v290
    %v988 = vunpack.c.h.b16 %v290
    %v989 = vunpack.c.l.b16 %v291
    %v990 = vunpack.c.h.b16 %v291
    %v991 = vunpack.c.l.b16 %v292
    %v992 = vunpack.c.h.b16 %v292
    %v993 = vunpack.c.l.b16 %v293
    %v994 = vunpack.c.h.b16 %v293
    %v995 = vunpack.c.l.b16 %v294
    %v996 = vunpack.c.h.b16 %v294
    %v997 = vunpack.c.l.b16 %v295
    %v998 = vunpack.c.h.b16 %v295
    %v999 = vunpack.c.l.b16 %v296
    %v1000 = vunpack.c.h.b16 %v296
    %v1001 = vunpack.c.l.b16 %v297
    %v1002 = vunpack.c.h.b16 %v297
    %v1003 = vunpack.c.l.b16 %v298
    %v1004 = vunpack.c.h.b16 %v298
    %v1005 = vunpack.c.l.b16 %v299
    %v1006 = vunpack.c.h.b16 %v299
    %v1007 = vunpack.c.l.b16 %v300
    %v1008 = vunpack.c.h.b16 %v300
    %v1009 = vunpack.c.l.b16 %v301
    %v1010 = vunpack.c.h.b16 %v301
    %v1011 = vunpack.c.l.b16 %v302
    %v1012 = vunpack.c.h.b16 %v302
    %v1013 = vunpack.c.l.b16 %v303
    %v1014 = vunpack.c.h.b16 %v303
    %v1015 = vunpack.c.l.b16 %v304
    %v1016 = vunpack.c.h.b16 %v304
    %v1017 = vunpack.c.l.b16 %v305
    %v1018 = vunpack.c.h.b16 %v305
    %v1019 = vunpack.c.l.b16 %v306
    %v1020 = vunpack.c.h.b16 %v306
    %v1021 = vunpack.c.l.b16 %v307
    %v1022 = vunpack.c.h.b16 %v307
    %v1023 = vunpack.c.l.b16 %v308
    %v1024 = vunpack.c.h.b16 %v308
    %v1025 = vunpack.c.l.b16 %v309
    %v1026 = vunpack.c.h.b16 %v309
    %v1027 = vunpack.c.l.b16 %v310
    %v1028 = vunpack.c.h.b16 %v310
    %v1029 = vunpack.c.l.b16 %v311
    %v1030 = vunpack.c.h.b16 %v311
    %v1031 = vunpack.c.l.b16 %v312
    %v1032 = vunpack.c.h.b16 %v312
    %v1033 = vunpack.c.l.b16 %v313
    %v1034 = vunpack.c.h.b16 %v313
    %v1035 = vunpack.c.l.b16 %v314
    %v1036 = vunpack.c.h.b16 %v314
    %v1037 = vunpack.c.l.b16 %v315
    %v1038 = vunpack.c.h.b16 %v315
    %v1039 = vunpack.c.l.b16 %v316
    %v1040 = vunpack.c.h.b16 %v316
    %v1041 = vunpack.c.l.b16 %v317
    %v1042 = vunpack.c.h.b16 %v317
    %v1043 = vunpack.c.l.b16 %v318
    %v1044 = vunpack.c.h.b16 %v318
    %v1045 = vunpack.c.l.b16 %v319
    %v1046 = vunpack.c.h.b16 %v319
    %v1047 = vunpack.c.l.b16 %v320
    %v1048 = vunpack.c.h.b16 %v320
    %v1049 = vunpack.c.l.b16 %v321
    %v1050 = vunpack.c.h.b16 %v321
    %v1051 = vunpack.c.l.b16 %v322
    %v1052 = vunpack.c.h.b16 %v322
    %v1053 = vunpack.c.l.b16 %v323
    %v1054 = vunpack.c.h.b16 %v323
    %v1055 = vunpack.c.l.b16 %v324
    %v1056 = vunpack.c.h.b16 %v324
    %v1057 = vunpack.c.l.b16 %v325
    %v1058 = vunpack.c.h.b16 %v325
    %v1059 = vunpack.c.l.b16 %v326
    %v1060 = vunpack.c.h.b16 %v326
    %v1061 = vunpack.c.l.b16 %v327
    %v1062 = vunpack.c.h.b16 %v327
    %v1063 = vunpack.c.l.b16 %v328
    %v1064 = vunpack.c.h.b16 %v328
    %v1065 = vunpack.c.l.b16 %v329
    %v1066 = vunpack.c.h.b16 %v329
    %v1067 = vunpack.c.l.b16 %v330
    %v1068 = vunpack.c.h.b16 %v330
    %v1069 = vunpack.c.l.b16 %v331
    %v1070 = vunpack.c.h.b16 %v331
    %v1071 = vunpack.c.l.b16 %v332
    %v1072 = vunpack.c.h.b16 %v332
    %v1073 = vunpack.c.l.b16 %v333
    %v1074 = vunpack.c.h.b16 %v333
    %v1075 = vunpack.c.l.b16 %v334
    %v1076 = vunpack.c.h.b16 %v334
    %v1077 = vunpack.c.l.b16 %v335
    %v1078 = vunpack.c.h.b16 %v335
    %v1079 = vunpack.c.l.b16 %v336
    %v1080 = vunpack.c.h.b16 %v336
    %v1081 = vunpack.c.l.b16 %v337
    %v1082 = vunpack.c.h.b16 %v337
    %v1083 = vunpack.c.l.b16 %v338
    %v1084 = vunpack.c.h.b16 %v338
    %v1085 = vunpack.c.l.b16 %v339
    %v1086 = vunpack.c.h.b16 %v339
    %v1087 = vunpack.c.l.b16 %v340
    %v1088 = vunpack.c.h.b16 %v340
    %v1089 = vunpack.c.l.b16 %v341
    %v1090 = vunpack.c.h.b16 %v341
    %v1091 = vunpack.c.l.b16 %v342
    %v1092 = vunpack.c.h.b16 %v342
    %v1093 = vunpack.c.l.b16 %v343
    %v1094 = vunpack.c.h.b16 %v343
    %v1095 = vunpack.c.l.b16 %v344
    %v1096 = vunpack.c.h.b16 %v344
    %v1097 = vunpack.c.l.b16 %v345
    %v1098 = vunpack.c.h.b16 %v345
    %v1099 = vunpack.c.l.b16 %v346
    %v1100 = vunpack.c.h.b16 %v346
    %v1101 = vunpack.c.l.b16 %v347
    %v1102 = vunpack.c.h.b16 %v347
    %v1103 = vunpack.c.l.b16 %v348
    %v1104 = vunpack.c.h.b16 %v348
    %v1105 = vunpack.c.l.b16 %v349
    %v1106 = vunpack.c.h.b16 %v349
    %v1107 = vunpack.c.l.b16 %v350
    %v1108 = vunpack.c.h.b16 %v350
    %v1109 = vunpack.c.l.b16 %v351
    %v1110 = vunpack.c.h.b16 %v351
    %v1111 = vunpack.c.l.b16 %v352
    %v1112 = vunpack.c.h.b16 %v352
    %v1113 = vunpack.c.l.b16 %v353
    %v1114 = vunpack.c.h.b16 %v353
    %v1115 = vunpack.c.l.b16 %v354
    %v1116 = vunpack.c.h.b16 %v354
    %v1117 = vunpack.c.l.b16 %v355
    %v1118 = vunpack.c.h.b16 %v355
    %v1119 = vunpack.c.l.b16 %v356
    %v1120 = vunpack.c.h.b16 %v356
    %v1121 = vunpack.c.l.b16 %v357
    %v1122 = vunpack.c.h.b16 %v357
    %v1123 = vunpack.c.l.b16 %v358
    %v1124 = vunpack.c.h.b16 %v358
    %v1125 = vunpack.c.l.b16 %v359
    %v1126 = vunpack.c.h.b16 %v359
    %v1127 = vunpack.c.l.b16 %v360
    %v1128 = vunpack.c.h.b16 %v360
    %v1129 = vunpack.c.l.b16 %v361
    %v1130 = vunpack.c.h.b16 %v361
    %v1131 = vunpack.c.l.b16 %v362
    %v1132 = vunpack.c.h.b16 %v362
    %v1133 = vunpack.c.l.b16 %v363
    %v1134 = vunpack.c.h.b16 %v363
    %v1135 = vunpack.c.l.b16 %v364
    %v1136 = vunpack.c.h.b16 %v364
    %v1137 = vunpack.c.l.b16 %v365
    %v1138 = vunpack.c.h.b16 %v365
    %v1139 = vunpack.c.l.b16 %v366
    %v1140 = vunpack.c.h.b16 %v366
    %v1141 = vunpack.c.l.b16 %v367
    %v1142 = vunpack.c.h.b16 %v367
    %v1143 = vunpack.c.l.b16 %v368
    %v1144 = vunpack.c.h.b16 %v368
    %v1145 = vunpack.c.l.b16 %v369
    %v1146 = vunpack.c.h.b16 %v369
    %v1147 = vunpack.c.l.b16 %v370
    %v1148 = vunpack.c.h.b16 %v370
    %v1149 = vunpack.c.l.b16 %v371
    %v1150 = vunpack.c.h.b16 %v371
    %v1151 = vunpack.c.l.b16 %v372
    %v1152 = vunpack.c.h.b16 %v372
    %v1153 = vpack.c.b16 %v643, %v641
    %v1154 = vpack.c.b16 %v644, %v642
    %v1155 = vpack.c.b16 %v647, %v645
    %v1156 = vpack.c.b16 %v648, %v646
    %v1157 = vpack.c.b16 %v651, %v649
    %v1158 = vpack.c.b16 %v652, %v650
    %v1159 = vpack.c.b16 %v655, %v653
    %v1160 = vpack.c.b16 %v656, %v654
    %v1161 = vpack.c.b16 %v659, %v657
    %v1162 = vpack.c.b16 %v660, %v658
    %v1163 = vpack.c.b16 %v663, %v661
    %v1164 = vpack.c.b16 %v664, %v662
    %v1165 = vpack.c.b16 %v667, %v665
    %v1166 = vpack.c.b16 %v668, %v666
    %v1167 = vpack.c.b16 %v671, %v669
    %v1168 = vpack.c.b16 %v672, %v670
    %v1169 = vpack.c.b16 %v675, %v673
    %v1170 = vpack.c.b16 %v676, %v674
    %v1171 = vpack.c.b16 %v679, %v677
    %v1172 = vpack.c.b16 %v680, %v678
    %v1173 = vpack.c.b16 %v683, %v681
    %v1174 = vpack.c.b16 %v684, %v682
    %v1175 = vpack.c.b16 %v687, %v685
    %v1176 = vpack.c.b16 %v688, %v686
    %v1177 = vpack.c.b16 %v691, %v689
    %v1178 = vpack.c.b16 %v692, %v690
    %v1179 = vpack.c.b16 %v695, %v693
    %v1180 = vpack.c.b16 %v696, %v694
    %v1181 = vpack.c.b16 %v699, %v697
    %v1182 = vpack.c.b16 %v700, %v698
    %v1183 = vpack.c.b16 %v703, %v701
    %v1184 = vpack.c.b16 %v704, %v702
    %v1185 = vpack.c.b16 %v707, %v705
    %v1186 = vpack.c.b16 %v708, %v706
    %v1187 = vpack.c.b16 %v711, %v709
    %v1188 = vpack.c.b16 %v712, %v710
    %v1189 = vpack.c.b16 %v715, %v713
    %v1190 = vpack.c.b16 %v716, %v714
    %v1191 = vpack.c.b16 %v719, %v717
    %v1192 = vpack.c.b16 %v720, %v718
    %v1193 = vpack.c.b16 %v723, %v721
    %v1194 = vpack.c.b16 %v724, %v722
    %v1195 = vpack.c.b16 %v727, %v725
    %v1196 = vpack.c.b16 %v728, %v726
    %v1197 = vpack.c.b16 %v731, %v729
    %v1198 = vpack.c.b16 %v732, %v730
    %v1199 = vpack.c.b16 %v735, %v733
    %v1200 = vpack.c.b16 %v736, %v734
    %v1201 = vpack.c.b16 %v739, %v737
    %v1202 = vpack.c.b16 %v740, %v738
    %v1203 = vpack.c.b16 %v743, %v741
    %v1204 = vpack.c.b16 %v744, %v742
    %v1205 = vpack.c.b16 %v747, %v745
    %v1206 = vpack.c.b16 %v748, %v746
    %v1207 = vpack.c.b16 %v751, %v749
    %v1208 = vpack.c.b16 %v752, %v750
    %v1209 = vpack.c.b16 %v755, %v753
    %v1210 = vpack.c.b16 %v756, %v754
    %v1211 = vpack.c.b16 %v759, %v757
    %v1212 = vpack.c.b16 %v760, %v758
    %v1213 = vpack.c.b16 %v763, %v761
    %v1214 = vpack.c.b16 %v764, %v762
    %v1215 = vpack.c.b16 %v767, %v765
    %v1216 = vpack.c.b16 %v768, %v766
    %v1217 = vpack.c.b16 %v771, %v769
    %v1218 = vpack.c.b16 %v772, %v770
    %v1219 = vpack.c.b16 %v775, %v773
    %v1220 = vpack.c.b16 %v776, %v774
    %v1221 = vpack.c.b16 %v779, %v777
    %v1222 = vpack.c.b16 %v780, %v778
    %v1223 = vpack.c.b16 %v783, %v781
    %v1224 = vpack.c.b16 %v784, %v782
    %v1225 = vpack.c.b16 %v787, %v785
    %v1226 = vpack.c.b16 %v788, %v786
    %v1227 = vpack.c.b16 %v791, %v789
    %v1228 = vpack.c.b16 %v792, %v790
    %v1229 = vpack.c.b16 %v795, %v793
    %v1230 = vpack.c.b16 %v796, %v794
    %v1231 = vpack.c.b16 %v799, %v797
    %v1232 = vpack.c.b16 %v800, %v798
    %v1233 = vpack.c.b16 %v803, %v801
    %v1234 = vpack.c.b16 %v804, %v802
    %v1235 = vpack.c.b16 %v807, %v805
    %v1236 = vpack.c.b16 %v808, %v806
    %v1237 = vpack.c.b16 %v811, %v809
    %v1238 = vpack.c.b16 %v812, %v810
    %v1239 = vpack.c.b16 %v815, %v813
    %v1240 = vpack.c.b16 %v816, %v814
    %v1241 = vpack.c.b16 %v819, %v817
    %v1242 = vpack.c.b16 %v820, %v818
    %v1243 = vpack.c.b16 %v823, %v821
    %v1244 = vpack.c.b16 %v824, %v822
    %v1245 = vpack.c.b16 %v827, %v825
    %v1246 = vpack.c.b16 %v828, %v826
    %v1247 = vpack.c.b16 %v831, %v829
    %v1248 = vpack.c.b16 %v832, %v830
    %v1249 = vpack.c.b16 %v835, %v833
    %v1250 = vpack.c.b16 %v836, %v834
    %v1251 = vpack.c.b16 %v839, %v837
    %v1252 = vpack.c.b16 %v840, %v838
    %v1253 = vpack.c.b16 %v843, %v841
    %v1254 = vpack.c.b16 %v844, %v842
    %v1255 = vpack.c.b16 %v847, %v845
    %v1256 = vpack.c.b16 %v848, %v846
    %v1257 = vpack.c.b16 %v851, %v849
    %v1258 = vpack.c.b16 %v852, %v850
    %v1259 = vpack.c.b16 %v855, %v853
    %v1260 = vpack.c.b16 %v856, %v854
    %v1261 = vpack.c.b16 %v859, %v857
    %v1262 = vpack.c.b16 %v860, %v858
    %v1263 = vpack.c.b16 %v863, %v861
    %v1264 = vpack.c.b16 %v864, %v862
    %v1265 = vpack.c.b16 %v867, %v865
    %v1266 = vpack.c.b16 %v868, %v866
    %v1267 = vpack.c.b16 %v871, %v869
    %v1268 = vpack.c.b16 %v872, %v870
    %v1269 = vpack.c.b16 %v875, %v873
    %v1270 = vpack.c.b16 %v876, %v874
    %v1271 = vpack.c.b16 %v879, %v877
    %v1272 = vpack.c.b16 %v880, %v878
    %v1273 = vpack.c.b16 %v883, %v881
    %v1274 = vpack.c.b16 %v884, %v882
    %v1275 = vpack.c.b16 %v887, %v885
    %v1276 = vpack.c.b16 %v888, %v886
    %v1277 = vpack.c.b16 %v891, %v889
    %v1278 = vpack.c.b16 %v892, %v890
    %v1279 = vpack.c.b16 %v895, %v893
    %v1280 = vpack.c.b16 %v896, %v894
    %v1281 = vpack.c.b16 %v899, %v897
    %v1282 = vpack.c.b16 %v900, %v898
    %v1283 = vpack.c.b16 %v903, %v901
    %v1284 = vpack.c.b16 %v904, %v902
    %v1285 = vpack.c.b16 %v907, %v905
    %v1286 = vpack.c.b16 %v908, %v906
    %v1287 = vpack.c.b16 %v911, %v909
    %v1288 = vpack.c.b16 %v912, %v910
    %v1289 = vpack.c.b16 %v915, %v913
    %v1290 = vpack.c.b16 %v916, %v914
    %v1291 = vpack.c.b16 %v919, %v917
    %v1292 = vpack.c.b16 %v920, %v918
    %v1293 = vpack.c.b16 %v923, %v921
    %v1294 = vpack.c.b16 %v924, %v922
    %v1295 = vpack.c.b16 %v927, %v925
    %v1296 = vpack.c.b16 %v928, %v926
    %v1297 = vpack.c.b16 %v931, %v929
    %v1298 = vpack.c.b16 %v932, %v930
    %v1299 = vpack.c.b16 %v935, %v933
    %v1300 = vpack.c.b16 %v936, %v934
    %v1301 = vpack.c.b16 %v939, %v937
    %v1302 = vpack.c.b16 %v940, %v938
    %v1303 = vpack.c.b16 %v943, %v941
    %v1304 = vpack.c.b16 %v944, %v942
    %v1305 = vpack.c.b16 %v947, %v945
    %v1306 = vpack.c.b16 %v948, %v946
    %v1307 = vpack.c.b16 %v951, %v949
    %v1308 = vpack.c.b16 %v952, %v950
    %v1309 = vpack.c.b16 %v955, %v953
    %v1310 = vpack.c.b16 %v956, %v954
    %v1311 = vpack.c.b16 %v959, %v957
    %v1312 = vpack.c.b16 %v960, %v958
    %v1313 = vpack.c.b16 %v963, %v961
    %v1314 = vpack.c.b16 %v964, %v962
    %v1315 = vpack.c.b16 %v967, %v965
    %v1316 = vpack.c.b16 %v968, %v966
    %v1317 = vpack.c.b16 %v971, %v969
    %v1318 = vpack.c.b16 %v972, %v970
    %v1319 = vpack.c.b16 %v975, %v973
    %v1320 = vpack.c.b16 %v976, %v974
    %v1321 = vpack.c.b16 %v979, %v977
    %v1322 = vpack.c.b16 %v980, %v978
    %v1323 = vpack.c.b16 %v983, %v981
    %v1324 = vpack.c.b16 %v984, %v982
    %v1325 = vpack.c.b16 %v987, %v985
    %v1326 = vpack.c.b16 %v988, %v986
    %v1327 = vpack.c.b16 %v991, %v989
    %v1328 = vpack.c.b16 %v992, %v990
    %v1329 = vpack.c.b16 %v995, %v993
    %v1330 = vpack.c.b16 %v996, %v994
    %v1331 = vpack.c.b16 %v999, %v997
    %v1332 = vpack.c.b16 %v1000, %v998
    %v1333 = vpack.c.b16 %v1003, %v1001
    %v1334 = vpack.c.b16 %v1004, %v1002
    %v1335 = vpack.c.b16 %v1007, %v1005
    %v1336 = vpack.c.b16 %v1008, %v1006
    %v1337 = vpack.c.b16 %v1011, %v1009
    %v1338 = vpack.c.b16 %v1012, %v1010
    %v1339 = vpack.c.b16 %v1015, %v1013
    %v1340 = vpack.c.b16 %v1016, %v1014
    %v1341 = vpack.c.b16 %v1019, %v1017
    %v1342 = vpack.c.b16 %v1020, %v1018
    %v1343 = vpack.c.b16 %v1023, %v1021
    %v1344 = vpack.c.b16 %v1024, %v1022
    %v1345 = vpack.c.b16 %v1027, %v1025
    %v1346 = vpack.c.b16 %v1028, %v1026
    %v1347 = vpack.c.b16 %v1031, %v1029
    %v1348 = vpack.c.b16 %v1032, %v1030
    %v1349 = vpack.c.b16 %v1035, %v1033
    %v1350 = vpack.c.b16 %v1036, %v1034
    %v1351 = vpack.c.b16 %v1039, %v1037
    %v1352 = vpack.c.b16 %v1040, %v1038
    %v1353 = vpack.c.b16 %v1043, %v1041
    %v1354 = vpack.c.b16 %v1044, %v1042
    %v1355 = vpack.c.b16 %v1047, %v1045
    %v1356 = vpack.c.b16 %v1048, %v1046
    %v1357 = vpack.c.b16 %v1051, %v1049
    %v1358 = vpack.c.b16 %v1052, %v1050
    %v1359 = vpack.c.b16 %v1055, %v1053
    %v1360 = vpack.c.b16 %v1056, %v1054
    %v1361 = vpack.c.b16 %v1059, %v1057
    %v1362 = vpack.c.b16 %v1060, %v1058
    %v1363 = vpack.c.b16 %v1063, %v1061
    %v1364 = vpack.c.b16 %v1064, %v1062
    %v1365 = vpack.c.b16 %v1067, %v1065
    %v1366 = vpack.c.b16 %v1068, %v1066
    %v1367 = vpack.c.b16 %v1071, %v1069
    %v1368 = vpack.c.b16 %v1072, %v1070
    %v1369 = vpack.c.b16 %v1075, %v1073
    %v1370 = vpack.c.b16 %v1076, %v1074
    %v1371 = vpack.c.b16 %v1079, %v1077
    %v1372 = vpack.c.b16 %v1080, %v1078
    %v1373 = vpack.c.b16 %v1083, %v1081
    %v1374 = vpack.c.b16 %v1084, %v1082
    %v1375 = vpack.c.b16 %v1087, %v1085
    %v1376 = vpack.c.b16 %v1088, %v1086
    %v1377 = vpack.c.b16 %v1091, %v1089
    %v1378 = vpack.c.b16 %v1092, %v1090
    %v1379 = vpack.c.b16 %v1095, %v1093
    %v1380 = vpack.c.b16 %v1096, %v1094
    %v1381 = vpack.c.b16 %v1099, %v1097
    %v1382 = vpack.c.b16 %v1100, %v1098
    %v1383 = vpack.c.b16 %v1103, %v1101
    %v1384 = vpack.c.b16 %v1104, %v1102
    %v1385 = vpack.c.b16 %v1107, %v1105
    %v1386 = vpack.c.b16 %v1108, %v1106
    %v1387 = vpack.c.b16 %v1111, %v1109
    %v1388 = vpack.c.b16 %v1112, %v1110
    %v1389 = vpack.c.b16 %v1115, %v1113
    %v1390 = vpack.c.b16 %v1116, %v1114
    %v1391 = vpack.c.b16 %v1119, %v1117
    %v1392 = vpack.c.b16 %v1120, %v1118
    %v1393 = vpack.c.b16 %v1123, %v1121
    %v1394 = vpack.c.b16 %v1124, %v1122
    %v1395 = vpack.c.b16 %v1127, %v1125
    %v1396 = vpack.c.b16 %v1128, %v1126
    %v1397 = vpack.c.b16 %v1131, %v1129
    %v1398 = vpack.c.b16 %v1132, %v1130
    %v1399 = vpack.c.b16 %v1135, %v1133
    %v1400 = vpack.c.b16 %v1136, %v1134
    %v1401 = vpack.c.b16 %v1139, %v1137
    %v1402 = vpack.c.b16 %v1140, %v1138
    %v1403 = vpack.c.b16 %v1143, %v1141
    %v1404 = vpack.c.b16 %v1144, %v1142
    %v1405 = vpack.c.b16 %v1147, %v1145
    %v1406 = vpack.c.b16 %v1148, %v1146
    %v1407 = vpack.c.b16 %v1151, %v1149
    %v1408 = vpack.c.b16 %v1152, %v1150
    %1665 = vmatprep.subr.bf16.mxu0 %v1168
    %1666 = vmatpush1.bf16.msra.mxu0 %v1167
    %1667 = vmatprep.subr.bf16.mxu0 %v1166
    %1668 = vmatpush1.bf16.msra.mxu0 %v1165
    %1669 = vmatprep.subr.bf16.mxu0 %v1164
    %1670 = vmatpush1.bf16.msra.mxu0 %v1163
    %1671 = vmatprep.subr.bf16.mxu0 %v1162
    %1672 = vmatpush1.bf16.msra.mxu0 %v1161
    %1673 = vmatprep.subr.bf16.mxu0 %v1160
    %1674 = vmatpush1.bf16.msra.mxu0 %v1159
    %1675 = vmatprep.subr.bf16.mxu0 %v1158
    %1676 = vmatpush1.bf16.msra.mxu0 %v1157
    %1677 = vmatprep.subr.bf16.mxu0 %v1156
    %1678 = vmatpush1.bf16.msra.mxu0 %v1155
    %1679 = vmatprep.subr.bf16.mxu0 %v1154
    %1680 = vmatpush1.bf16.msra.mxu0 %v1153
    %1681 = vmatprep.subr.bf16.mxu0 %v1184
    %1682 = vmatpush2.bf16.msra.mxu0 %v1183
    %1683 = vmatprep.subr.bf16.mxu0 %v1182
    %1684 = vmatpush2.bf16.msra.mxu0 %v1181
    %1685 = vmatprep.subr.bf16.mxu0 %v1180
    %1686 = vmatpush2.bf16.msra.mxu0 %v1179
    %1687 = vmatprep.subr.bf16.mxu0 %v1178
    %1688 = vmatpush2.bf16.msra.mxu0 %v1177
    %1689 = vmatprep.subr.bf16.mxu0 %v1176
    %1690 = vmatpush2.bf16.msra.mxu0 %v1175
    %1691 = vmatprep.subr.bf16.mxu0 %v1174
    %1692 = vmatpush2.bf16.msra.mxu0 %v1173
    %1693 = vmatprep.subr.bf16.mxu0 %v1172
    %1694 = vmatpush2.bf16.msra.mxu0 %v1171
    %1695 = vmatprep.subr.bf16.mxu0 %v1170
    %1696 = vmatpush2.bf16.msra.mxu0 %v1169
    %1697 = vmatprep.mubr.bf16.mxu0 %v102
    %1698 = vmatmul.mubr.bf16.gmra.mxu0 %v101
    %v1699 = vpop.f32.mrf.mxu0
    %v1700 = vadd.f32 %v378, %v1699
    %v1701 = vpop.f32.mrf.mxu0
    %v1702 = vadd.f32 %v382, %v1701
    %v1703 = vpop.f32.mrf.mxu0
    %v1704 = vadd.f32 %v378, %v1703
    %v1705 = vpop.f32.mrf.mxu0
    %v1706 = vadd.f32 %v382, %v1705
    %1707 = vdwg.mxu0
    %1708 = vmatprep.subr.bf16.mxu0 %v1200
    %1709 = vmatpush1.bf16.msra.mxu0 %v1199
    %1710 = vmatprep.subr.bf16.mxu0 %v1198
    %1711 = vmatpush1.bf16.msra.mxu0 %v1197
    %1712 = vmatprep.subr.bf16.mxu0 %v1196
    %1713 = vmatpush1.bf16.msra.mxu0 %v1195
    %1714 = vmatprep.subr.bf16.mxu0 %v1194
    %1715 = vmatpush1.bf16.msra.mxu0 %v1193
    %1716 = vmatprep.subr.bf16.mxu0 %v1192
    %1717 = vmatpush1.bf16.msra.mxu0 %v1191
    %1718 = vmatprep.subr.bf16.mxu0 %v1190
    %1719 = vmatpush1.bf16.msra.mxu0 %v1189
    %1720 = vmatprep.subr.bf16.mxu0 %v1188
    %1721 = vmatpush1.bf16.msra.mxu0 %v1187
    %1722 = vmatprep.subr.bf16.mxu0 %v1186
    %1723 = vmatpush1.bf16.msra.mxu0 %v1185
    %1724 = vmatprep.subr.bf16.mxu0 %v1216
    %1725 = vmatpush2.bf16.msra.mxu0 %v1215
    %1726 = vmatprep.subr.bf16.mxu0 %v1214
    %1727 = vmatpush2.bf16.msra.mxu0 %v1213
    %1728 = vmatprep.subr.bf16.mxu0 %v1212
    %1729 = vmatpush2.bf16.msra.mxu0 %v1211
    %1730 = vmatprep.subr.bf16.mxu0 %v1210
    %1731 = vmatpush2.bf16.msra.mxu0 %v1209
    %1732 = vmatprep.subr.bf16.mxu0 %v1208
    %1733 = vmatpush2.bf16.msra.mxu0 %v1207
    %1734 = vmatprep.subr.bf16.mxu0 %v1206
    %1735 = vmatpush2.bf16.msra.mxu0 %v1205
    %1736 = vmatprep.subr.bf16.mxu0 %v1204
    %1737 = vmatpush2.bf16.msra.mxu0 %v1203
    %1738 = vmatprep.subr.bf16.mxu0 %v1202
    %1739 = vmatpush2.bf16.msra.mxu0 %v1201
    %1740 = vmatprep.mubr.bf16.mxu0 %v104
    %1741 = vmatmul.mubr.bf16.gmra.mxu0 %v103
    %v1742 = vpop.f32.mrf.mxu0
    %v1743 = vadd.f32 %v1700, %v1742
    %v1744 = vpop.f32.mrf.mxu0
    %v1745 = vadd.f32 %v1702, %v1744
    %v1746 = vpop.f32.mrf.mxu0
    %v1747 = vadd.f32 %v1704, %v1746
    %v1748 = vpop.f32.mrf.mxu0
    %v1749 = vadd.f32 %v1706, %v1748
    %1750 = vdwg.mxu0
    %1751 = vmatprep.subr.bf16.mxu0 %v1232
    %1752 = vmatpush1.bf16.msra.mxu0 %v1231
    %1753 = vmatprep.subr.bf16.mxu0 %v1230
    %1754 = vmatpush1.bf16.msra.mxu0 %v1229
    %1755 = vmatprep.subr.bf16.mxu0 %v1228
    %1756 = vmatpush1.bf16.msra.mxu0 %v1227
    %1757 = vmatprep.subr.bf16.mxu0 %v1226
    %1758 = vmatpush1.bf16.msra.mxu0 %v1225
    %1759 = vmatprep.subr.bf16.mxu0 %v1224
    %1760 = vmatpush1.bf16.msra.mxu0 %v1223
    %1761 = vmatprep.subr.bf16.mxu0 %v1222
    %1762 = vmatpush1.bf16.msra.mxu0 %v1221
    %1763 = vmatprep.subr.bf16.mxu0 %v1220
    %1764 = vmatpush1.bf16.msra.mxu0 %v1219
    %1765 = vmatprep.subr.bf16.mxu0 %v1218
    %1766 = vmatpush1.bf16.msra.mxu0 %v1217
    %1767 = vmatprep.subr.bf16.mxu0 %v1248
    %1768 = vmatpush2.bf16.msra.mxu0 %v1247
    %1769 = vmatprep.subr.bf16.mxu0 %v1246
    %1770 = vmatpush2.bf16.msra.mxu0 %v1245
    %1771 = vmatprep.subr.bf16.mxu0 %v1244
    %1772 = vmatpush2.bf16.msra.mxu0 %v1243
    %1773 = vmatprep.subr.bf16.mxu0 %v1242
    %1774 = vmatpush2.bf16.msra.mxu0 %v1241
    %1775 = vmatprep.subr.bf16.mxu0 %v1240
    %1776 = vmatpush2.bf16.msra.mxu0 %v1239
    %1777 = vmatprep.subr.bf16.mxu0 %v1238
    %1778 = vmatpush2.bf16.msra.mxu0 %v1237
    %1779 = vmatprep.subr.bf16.mxu0 %v1236
    %1780 = vmatpush2.bf16.msra.mxu0 %v1235
    %1781 = vmatprep.subr.bf16.mxu0 %v1234
    %1782 = vmatpush2.bf16.msra.mxu0 %v1233
    %1783 = vmatprep.mubr.bf16.mxu0 %v106
    %1784 = vmatmul.mubr.bf16.gmra.mxu0 %v105
    %v1785 = vpop.f32.mrf.mxu0
    %v1786 = vadd.f32 %v1743, %v1785
    %v1787 = vpop.f32.mrf.mxu0
    %v1788 = vadd.f32 %v1745, %v1787
    %v1789 = vpop.f32.mrf.mxu0
    %v1790 = vadd.f32 %v1747, %v1789
    %v1791 = vpop.f32.mrf.mxu0
    %v1792 = vadd.f32 %v1749, %v1791
    %1793 = vdwg.mxu0
    %1794 = vmatprep.subr.bf16.mxu0 %v1264
    %1795 = vmatpush1.bf16.msra.mxu0 %v1263
    %1796 = vmatprep.subr.bf16.mxu0 %v1262
    %1797 = vmatpush1.bf16.msra.mxu0 %v1261
    %1798 = vmatprep.subr.bf16.mxu0 %v1260
    %1799 = vmatpush1.bf16.msra.mxu0 %v1259
    %1800 = vmatprep.subr.bf16.mxu0 %v1258
    %1801 = vmatpush1.bf16.msra.mxu0 %v1257
    %1802 = vmatprep.subr.bf16.mxu0 %v1256
    %1803 = vmatpush1.bf16.msra.mxu0 %v1255
    %1804 = vmatprep.subr.bf16.mxu0 %v1254
    %1805 = vmatpush1.bf16.msra.mxu0 %v1253
    %1806 = vmatprep.subr.bf16.mxu0 %v1252
    %1807 = vmatpush1.bf16.msra.mxu0 %v1251
    %1808 = vmatprep.subr.bf16.mxu0 %v1250
    %1809 = vmatpush1.bf16.msra.mxu0 %v1249
    %1810 = vmatprep.subr.bf16.mxu0 %v1280
    %1811 = vmatpush2.bf16.msra.mxu0 %v1279
    %1812 = vmatprep.subr.bf16.mxu0 %v1278
    %1813 = vmatpush2.bf16.msra.mxu0 %v1277
    %1814 = vmatprep.subr.bf16.mxu0 %v1276
    %1815 = vmatpush2.bf16.msra.mxu0 %v1275
    %1816 = vmatprep.subr.bf16.mxu0 %v1274
    %1817 = vmatpush2.bf16.msra.mxu0 %v1273
    %1818 = vmatprep.subr.bf16.mxu0 %v1272
    %1819 = vmatpush2.bf16.msra.mxu0 %v1271
    %1820 = vmatprep.subr.bf16.mxu0 %v1270
    %1821 = vmatpush2.bf16.msra.mxu0 %v1269
    %1822 = vmatprep.subr.bf16.mxu0 %v1268
    %1823 = vmatpush2.bf16.msra.mxu0 %v1267
    %1824 = vmatprep.subr.bf16.mxu0 %v1266
    %1825 = vmatpush2.bf16.msra.mxu0 %v1265
    %1826 = vmatprep.mubr.bf16.mxu0 %v108
    %1827 = vmatmul.mubr.bf16.gmra.mxu0 %v107
    %v1828 = vpop.f32.mrf.mxu0
    %v1829 = vadd.f32 %v1786, %v1828
    %v1830 = vpop.f32.mrf.mxu0
    %v1831 = vadd.f32 %v1788, %v1830
    %v1832 = vpop.f32.mrf.mxu0
    %v1833 = vadd.f32 %v1790, %v1832
    %v1834 = vpop.f32.mrf.mxu0
    %v1835 = vadd.f32 %v1792, %v1834
    %1836 = vdwg.mxu0
    %1837 = vmatprep.subr.bf16.mxu0 %v1296
    %1838 = vmatpush1.bf16.msra.mxu0 %v1295
    %1839 = vmatprep.subr.bf16.mxu0 %v1294
    %1840 = vmatpush1.bf16.msra.mxu0 %v1293
    %1841 = vmatprep.subr.bf16.mxu0 %v1292
    %1842 = vmatpush1.bf16.msra.mxu0 %v1291
    %1843 = vmatprep.subr.bf16.mxu0 %v1290
    %1844 = vmatpush1.bf16.msra.mxu0 %v1289
    %1845 = vmatprep.subr.bf16.mxu0 %v1288
    %1846 = vmatpush1.bf16.msra.mxu0 %v1287
    %1847 = vmatprep.subr.bf16.mxu0 %v1286
    %1848 = vmatpush1.bf16.msra.mxu0 %v1285
    %1849 = vmatprep.subr.bf16.mxu0 %v1284
    %1850 = vmatpush1.bf16.msra.mxu0 %v1283
    %1851 = vmatprep.subr.bf16.mxu0 %v1282
    %1852 = vmatpush1.bf16.msra.mxu0 %v1281
    %1853 = vmatprep.subr.bf16.mxu0 %v1312
    %1854 = vmatpush2.bf16.msra.mxu0 %v1311
    %1855 = vmatprep.subr.bf16.mxu0 %v1310
    %1856 = vmatpush2.bf16.msra.mxu0 %v1309
    %1857 = vmatprep.subr.bf16.mxu0 %v1308
    %1858 = vmatpush2.bf16.msra.mxu0 %v1307
    %1859 = vmatprep.subr.bf16.mxu0 %v1306
    %1860 = vmatpush2.bf16.msra.mxu0 %v1305
    %1861 = vmatprep.subr.bf16.mxu0 %v1304
    %1862 = vmatpush2.bf16.msra.mxu0 %v1303
    %1863 = vmatprep.subr.bf16.mxu0 %v1302
    %1864 = vmatpush2.bf16.msra.mxu0 %v1301
    %1865 = vmatprep.subr.bf16.mxu0 %v1300
    %1866 = vmatpush2.bf16.msra.mxu0 %v1299
    %1867 = vmatprep.subr.bf16.mxu0 %v1298
    %1868 = vmatpush2.bf16.msra.mxu0 %v1297
    %1869 = vmatprep.mubr.bf16.mxu0 %v110
    %1870 = vmatmul.mubr.bf16.gmra.mxu0 %v109
    %v1871 = vpop.f32.mrf.mxu0
    %v1872 = vadd.f32 %v1829, %v1871
    %v1873 = vpop.f32.mrf.mxu0
    %v1874 = vadd.f32 %v1831, %v1873
    %v1875 = vpop.f32.mrf.mxu0
    %v1876 = vadd.f32 %v1833, %v1875
    %v1877 = vpop.f32.mrf.mxu0
    %v1878 = vadd.f32 %v1835, %v1877
    %1879 = vdwg.mxu0
    %1880 = vmatprep.subr.bf16.mxu0 %v1328
    %1881 = vmatpush1.bf16.msra.mxu0 %v1327
    %1882 = vmatprep.subr.bf16.mxu0 %v1326
    %1883 = vmatpush1.bf16.msra.mxu0 %v1325
    %1884 = vmatprep.subr.bf16.mxu0 %v1324
    %1885 = vmatpush1.bf16.msra.mxu0 %v1323
    %1886 = vmatprep.subr.bf16.mxu0 %v1322
    %1887 = vmatpush1.bf16.msra.mxu0 %v1321
    %1888 = vmatprep.subr.bf16.mxu0 %v1320
    %1889 = vmatpush1.bf16.msra.mxu0 %v1319
    %1890 = vmatprep.subr.bf16.mxu0 %v1318
    %1891 = vmatpush1.bf16.msra.mxu0 %v1317
    %1892 = vmatprep.subr.bf16.mxu0 %v1316
    %1893 = vmatpush1.bf16.msra.mxu0 %v1315
    %1894 = vmatprep.subr.bf16.mxu0 %v1314
    %1895 = vmatpush1.bf16.msra.mxu0 %v1313
    %1896 = vmatprep.subr.bf16.mxu0 %v1344
    %1897 = vmatpush2.bf16.msra.mxu0 %v1343
    %1898 = vmatprep.subr.bf16.mxu0 %v1342
    %1899 = vmatpush2.bf16.msra.mxu0 %v1341
    %1900 = vmatprep.subr.bf16.mxu0 %v1340
    %1901 = vmatpush2.bf16.msra.mxu0 %v1339
    %1902 = vmatprep.subr.bf16.mxu0 %v1338
    %1903 = vmatpush2.bf16.msra.mxu0 %v1337
    %1904 = vmatprep.subr.bf16.mxu0 %v1336
    %1905 = vmatpush2.bf16.msra.mxu0 %v1335
    %1906 = vmatprep.subr.bf16.mxu0 %v1334
    %1907 = vmatpush2.bf16.msra.mxu0 %v1333
    %1908 = vmatprep.subr.bf16.mxu0 %v1332
    %1909 = vmatpush2.bf16.msra.mxu0 %v1331
    %1910 = vmatprep.subr.bf16.mxu0 %v1330
    %1911 = vmatpush2.bf16.msra.mxu0 %v1329
    %1912 = vmatprep.mubr.bf16.mxu0 %v112
    %1913 = vmatmul.mubr.bf16.gmra.mxu0 %v111
    %v1914 = vpop.f32.mrf.mxu0
    %v1915 = vadd.f32 %v1872, %v1914
    %v1916 = vpop.f32.mrf.mxu0
    %v1917 = vadd.f32 %v1874, %v1916
    %v1918 = vpop.f32.mrf.mxu0
    %v1919 = vadd.f32 %v1876, %v1918
    %v1920 = vpop.f32.mrf.mxu0
    %v1921 = vadd.f32 %v1878, %v1920
    %1922 = vdwg.mxu0
    %1923 = vmatprep.subr.bf16.mxu0 %v1360
    %1924 = vmatpush1.bf16.msra.mxu0 %v1359
    %1925 = vmatprep.subr.bf16.mxu0 %v1358
    %1926 = vmatpush1.bf16.msra.mxu0 %v1357
    %1927 = vmatprep.subr.bf16.mxu0 %v1356
    %1928 = vmatpush1.bf16.msra.mxu0 %v1355
    %1929 = vmatprep.subr.bf16.mxu0 %v1354
    %1930 = vmatpush1.bf16.msra.mxu0 %v1353
    %1931 = vmatprep.subr.bf16.mxu0 %v1352
    %1932 = vmatpush1.bf16.msra.mxu0 %v1351
    %1933 = vmatprep.subr.bf16.mxu0 %v1350
    %1934 = vmatpush1.bf16.msra.mxu0 %v1349
    %1935 = vmatprep.subr.bf16.mxu0 %v1348
    %1936 = vmatpush1.bf16.msra.mxu0 %v1347
    %1937 = vmatprep.subr.bf16.mxu0 %v1346
    %1938 = vmatpush1.bf16.msra.mxu0 %v1345
    %1939 = vmatprep.subr.bf16.mxu0 %v1376
    %1940 = vmatpush2.bf16.msra.mxu0 %v1375
    %1941 = vmatprep.subr.bf16.mxu0 %v1374
    %1942 = vmatpush2.bf16.msra.mxu0 %v1373
    %1943 = vmatprep.subr.bf16.mxu0 %v1372
    %1944 = vmatpush2.bf16.msra.mxu0 %v1371
    %1945 = vmatprep.subr.bf16.mxu0 %v1370
    %1946 = vmatpush2.bf16.msra.mxu0 %v1369
    %1947 = vmatprep.subr.bf16.mxu0 %v1368
    %1948 = vmatpush2.bf16.msra.mxu0 %v1367
    %1949 = vmatprep.subr.bf16.mxu0 %v1366
    %1950 = vmatpush2.bf16.msra.mxu0 %v1365
    %1951 = vmatprep.subr.bf16.mxu0 %v1364
    %1952 = vmatpush2.bf16.msra.mxu0 %v1363
    %1953 = vmatprep.subr.bf16.mxu0 %v1362
    %1954 = vmatpush2.bf16.msra.mxu0 %v1361
    %1955 = vmatprep.mubr.bf16.mxu0 %v114
    %1956 = vmatmul.mubr.bf16.gmra.mxu0 %v113
    %v1957 = vpop.f32.mrf.mxu0
    %v1958 = vadd.f32 %v1915, %v1957
    %v1959 = vpop.f32.mrf.mxu0
    %v1960 = vadd.f32 %v1917, %v1959
    %v1961 = vpop.f32.mrf.mxu0
    %v1962 = vadd.f32 %v1919, %v1961
    %v1963 = vpop.f32.mrf.mxu0
    %v1964 = vadd.f32 %v1921, %v1963
    %1965 = vdwg.mxu0
    %1966 = vmatprep.subr.bf16.mxu0 %v1392
    %1967 = vmatpush1.bf16.msra.mxu0 %v1391
    %1968 = vmatprep.subr.bf16.mxu0 %v1390
    %1969 = vmatpush1.bf16.msra.mxu0 %v1389
    %1970 = vmatprep.subr.bf16.mxu0 %v1388
    %1971 = vmatpush1.bf16.msra.mxu0 %v1387
    %1972 = vmatprep.subr.bf16.mxu0 %v1386
    %1973 = vmatpush1.bf16.msra.mxu0 %v1385
    %1974 = vmatprep.subr.bf16.mxu0 %v1384
    %1975 = vmatpush1.bf16.msra.mxu0 %v1383
    %1976 = vmatprep.subr.bf16.mxu0 %v1382
    %1977 = vmatpush1.bf16.msra.mxu0 %v1381
    %1978 = vmatprep.subr.bf16.mxu0 %v1380
    %1979 = vmatpush1.bf16.msra.mxu0 %v1379
    %1980 = vmatprep.subr.bf16.mxu0 %v1378
    %1981 = vmatpush1.bf16.msra.mxu0 %v1377
    %1982 = vmatprep.subr.bf16.mxu0 %v1408
    %1983 = vmatpush2.bf16.msra.mxu0 %v1407
    %1984 = vmatprep.subr.bf16.mxu0 %v1406
    %1985 = vmatpush2.bf16.msra.mxu0 %v1405
    %1986 = vmatprep.subr.bf16.mxu0 %v1404
    %1987 = vmatpush2.bf16.msra.mxu0 %v1403
    %1988 = vmatprep.subr.bf16.mxu0 %v1402
    %1989 = vmatpush2.bf16.msra.mxu0 %v1401
    %1990 = vmatprep.subr.bf16.mxu0 %v1400
    %1991 = vmatpush2.bf16.msra.mxu0 %v1399
    %1992 = vmatprep.subr.bf16.mxu0 %v1398
    %1993 = vmatpush2.bf16.msra.mxu0 %v1397
    %1994 = vmatprep.subr.bf16.mxu0 %v1396
    %1995 = vmatpush2.bf16.msra.mxu0 %v1395
    %1996 = vmatprep.subr.bf16.mxu0 %v1394
    %1997 = vmatpush2.bf16.msra.mxu0 %v1393
    %1998 = vmatprep.mubr.bf16.mxu0 %v116
    %1999 = vmatmul.mubr.bf16.gmra.mxu0 %v115
    %v2000 = vpop.f32.mrf.mxu0
    %v2001 = vadd.f32 %v1958, %v2000
    %v2002 = vpop.f32.mrf.mxu0
    %v2003 = vadd.f32 %v1960, %v2002
    %v2004 = vpop.f32.mrf.mxu0
    %v2005 = vadd.f32 %v1962, %v2004
    %v2006 = vpop.f32.mrf.mxu0
    %v2007 = vadd.f32 %v1964, %v2006
    %2008 = vdwg.mxu0
    %v2009 = vmax.f32 %v2001, 0.0
    %v2010 = vmax.f32 %v2003, 0.0
    %v2011 = vmax.f32 %v2005, 0.0
    %v2012 = vmax.f32 %v2007, 0.0
    %v2013 = vld [vmem:[#allocation2] sm:$0xff]
    %v2014 = vld [vmem:[#allocation2 + $0x8] sm:$0xff]
    %v2015 = vpack.c.bf16 %v2011, %v2009
    %v2016 = vpack.c.bf16 %v2012, %v2010
    %v2017 = vld [vmem:[#allocation8] sm:$0xf]
    %v2018 = vld [vmem:[#allocation8 + $0x4] sm:$0xf]
    %v2019 = vld [vmem:[#allocation8 + $0x8] sm:$0xf]
    %v2020 = vld [vmem:[#allocation8 + $0xc] sm:$0xf]
    %v2021 = vld [vmem:[#allocation8 + $0x10] sm:$0xf]
    %v2022 = vld [vmem:[#allocation8 + $0x14] sm:$0xf]
    %v2023 = vld [vmem:[#allocation8 + $0x18] sm:$0xf]
    %v2024 = vld [vmem:[#allocation8 + $0x1c] sm:$0xf]
    %v2025 = vld [vmem:[#allocation8 + $0x20] sm:$0xf]
    %v2026 = vld [vmem:[#allocation8 + $0x24] sm:$0xf]
    %v2027 = vld [vmem:[#allocation8 + $0x28] sm:$0xf]
    %v2028 = vld [vmem:[#allocation8 + $0x2c] sm:$0xf]
    %v2029 = vld [vmem:[#allocation8 + $0x30] sm:$0xf]
    %v2030 = vld [vmem:[#allocation8 + $0x34] sm:$0xf]
    %v2031 = vld [vmem:[#allocation8 + $0x38] sm:$0xf]
    %v2032 = vld [vmem:[#allocation8 + $0x3c] sm:$0xf]
    %v2033 = vld [vmem:[#allocation8 + $0x40] sm:$0xf]
    %v2034 = vld [vmem:[#allocation8 + $0x44] sm:$0xf]
    %v2035 = vld [vmem:[#allocation8 + $0x48] sm:$0xf]
    %v2036 = vld [vmem:[#allocation8 + $0x4c] sm:$0xf]
    %v2037 = vld [vmem:[#allocation8 + $0x50] sm:$0xf]
    %v2038 = vld [vmem:[#allocation8 + $0x54] sm:$0xf]
    %v2039 = vld [vmem:[#allocation8 + $0x58] sm:$0xf]
    %v2040 = vld [vmem:[#allocation8 + $0x5c] sm:$0xf]
    %v2041 = vld [vmem:[#allocation8 + $0x60] sm:$0xf]
    %v2042 = vld [vmem:[#allocation8 + $0x64] sm:$0xf]
    %v2043 = vld [vmem:[#allocation8 + $0x68] sm:$0xf]
    %v2044 = vld [vmem:[#allocation8 + $0x6c] sm:$0xf]
    %v2045 = vld [vmem:[#allocation8 + $0x70] sm:$0xf]
    %v2046 = vld [vmem:[#allocation8 + $0x74] sm:$0xf]
    %v2047 = vld [vmem:[#allocation8 + $0x78] sm:$0xf]
    %v2048 = vld [vmem:[#allocation8 + $0x7c] sm:$0xf]
    %v2081 = vunpack.c.l.b16 %v2017
    %v2082 = vunpack.c.l.b16 %v2018
    %v2083 = vunpack.c.l.b16 %v2019
    %v2084 = vunpack.c.l.b16 %v2020
    %v2085 = vunpack.c.l.b16 %v2021
    %v2086 = vunpack.c.l.b16 %v2022
    %v2087 = vunpack.c.l.b16 %v2023
    %v2088 = vunpack.c.l.b16 %v2024
    %v2089 = vunpack.c.l.b16 %v2025
    %v2090 = vunpack.c.l.b16 %v2026
    %v2091 = vunpack.c.l.b16 %v2027
    %v2092 = vunpack.c.l.b16 %v2028
    %v2093 = vunpack.c.l.b16 %v2029
    %v2094 = vunpack.c.l.b16 %v2030
    %v2095 = vunpack.c.l.b16 %v2031
    %v2096 = vunpack.c.l.b16 %v2032
    %v2097 = vunpack.c.l.b16 %v2033
    %v2098 = vunpack.c.l.b16 %v2034
    %v2099 = vunpack.c.l.b16 %v2035
    %v2100 = vunpack.c.l.b16 %v2036
    %v2101 = vunpack.c.l.b16 %v2037
    %v2102 = vunpack.c.l.b16 %v2038
    %v2103 = vunpack.c.l.b16 %v2039
    %v2104 = vunpack.c.l.b16 %v2040
    %v2105 = vunpack.c.l.b16 %v2041
    %v2106 = vunpack.c.l.b16 %v2042
    %v2107 = vunpack.c.l.b16 %v2043
    %v2108 = vunpack.c.l.b16 %v2044
    %v2109 = vunpack.c.l.b16 %v2045
    %v2110 = vunpack.c.l.b16 %v2046
    %v2111 = vunpack.c.l.b16 %v2047
    %v2112 = vunpack.c.l.b16 %v2048
    %v2113 = vpack.c.b16 %v2082, %v2081
    %v2114 = vpack.c.b16 %v2084, %v2083
    %v2115 = vpack.c.b16 %v2086, %v2085
    %v2116 = vpack.c.b16 %v2088, %v2087
    %v2117 = vpack.c.b16 %v2090, %v2089
    %v2118 = vpack.c.b16 %v2092, %v2091
    %v2119 = vpack.c.b16 %v2094, %v2093
    %v2120 = vpack.c.b16 %v2096, %v2095
    %v2121 = vpack.c.b16 %v2098, %v2097
    %v2122 = vpack.c.b16 %v2100, %v2099
    %v2123 = vpack.c.b16 %v2102, %v2101
    %v2124 = vpack.c.b16 %v2104, %v2103
    %v2125 = vpack.c.b16 %v2106, %v2105
    %v2126 = vpack.c.b16 %v2108, %v2107
    %v2127 = vpack.c.b16 %v2110, %v2109
    %v2128 = vpack.c.b16 %v2112, %v2111
    %2145 = vmatprep.subr.bf16.mxu0 0
    %2146 = vmatpush1.bf16.msra.mxu0 %v2120
    %2147 = vmatprep.subr.bf16.mxu0 0
    %2148 = vmatpush1.bf16.msra.mxu0 %v2119
    %2149 = vmatprep.subr.bf16.mxu0 0
    %2150 = vmatpush1.bf16.msra.mxu0 %v2118
    %2151 = vmatprep.subr.bf16.mxu0 0
    %2152 = vmatpush1.bf16.msra.mxu0 %v2117
    %2153 = vmatprep.subr.bf16.mxu0 0
    %2154 = vmatpush1.bf16.msra.mxu0 %v2116
    %2155 = vmatprep.subr.bf16.mxu0 0
    %2156 = vmatpush1.bf16.msra.mxu0 %v2115
    %2157 = vmatprep.subr.bf16.mxu0 0
    %2158 = vmatpush1.bf16.msra.mxu0 %v2114
    %2159 = vmatprep.subr.bf16.mxu0 0
    %2160 = vmatpush1.bf16.msra.mxu0 %v2113
    %2161 = vmatprep.subr.bf16.mxu0 0
    %2162 = vmatpush2.bf16.msra.mxu0 %v2128
    %2163 = vmatprep.subr.bf16.mxu0 0
    %2164 = vmatpush2.bf16.msra.mxu0 %v2127
    %2165 = vmatprep.subr.bf16.mxu0 0
    %2166 = vmatpush2.bf16.msra.mxu0 %v2126
    %2167 = vmatprep.subr.bf16.mxu0 0
    %2168 = vmatpush2.bf16.msra.mxu0 %v2125
    %2169 = vmatprep.subr.bf16.mxu0 0
    %2170 = vmatpush2.bf16.msra.mxu0 %v2124
    %2171 = vmatprep.subr.bf16.mxu0 0
    %2172 = vmatpush2.bf16.msra.mxu0 %v2123
    %2173 = vmatprep.subr.bf16.mxu0 0
    %2174 = vmatpush2.bf16.msra.mxu0 %v2122
    %2175 = vmatprep.subr.bf16.mxu0 0
    %2176 = vmatpush2.bf16.msra.mxu0 %v2121
    %2177 = vmatprep.mubr.bf16.mxu0 %v2016
    %2178 = vmatmul.mubr.bf16.gmra.mxu0 %v2015
    %v2179 = vpop.f32.mrf.mxu0
    %v2180 = vadd.f32 0.0, %v2179
    %v2181 = vpop.f32.mrf.mxu0
    %v2182 = vpop.f32.mrf.mxu0
    %v2183 = vadd.f32 0.0, %v2182
    %v2184 = vpop.f32.mrf.mxu0
    %2185 = vdwg.mxu0
    %v2186 = vadd.f32 %v2013, %v2180
    %v2187 = vadd.f32 %v2014, %v2183
    %2188 = vst [vmem:[#allocation2] sm:$0xff] %v2186
    %2189 = vst [vmem:[#allocation2 + $0x8] sm:$0xff] %v2187
    // Predicated region
    $region38: #{tpu_custom_call.1} parent=1 // pred_check
      %p2190 = pneg %p63
    $region39: #{tpu_custom_call.1} parent=1 // pred_check_branch
      %2192 = sbr.rel (%p2190) target = $region41
    $region40: #{tpu_custom_call.1} parent=1 // pred_region
      %v2193 = vld [vmem:[#allocation2] sm:$0xff]
      %v2194 = vld [vmem:[#allocation2 + $0x8] sm:$0xff]
      %v2195 = vld [vmem:[%s4] sm:$0x1]
      %v2197 = vlaneseq
      %v2198 = vshrl.u32 %v2197, 7
      %v2199 = vsub.s32 0, %v2198
      %v2200 = vrot.slane %v2195, %v2199
      %v2202 = vadd.f32 %v2193, %v2200
      %v2203 = vadd.f32 %v2194, %v2200
      %2204 = vmax.xlane.f32.xlu0 %v2202
      %v2205 = vpop.xlane.xlu0 %2204
      %2206 = vmax.xlane.f32.xlu0 %v2203
      %v2207 = vpop.xlane.xlu0 %2206
      %v2208 = vsub.f32 %v2202, %v2205
      %v2209 = vsub.f32 %v2203, %v2207
      %v2210 = vmul.f32 %v2208, 1.442695
      %v2211 = vpow.pop %v2210
      %v2212 = vmul.f32 %v2209, 1.442695
      %v2213 = vpow.pop %v2212
      %2214 = vadd.xlane.f32.xlu0 %v2211
      %v2215 = vpop.xlane.xlu0 %2214
      %2216 = vadd.xlane.f32.xlu0 %v2213
      %v2217 = vpop.xlane.xlu0 %2216
      %v2218 = vlog2.pop %v2215
      %v2219 = vmul.f32 %v2218, 0.6931472
      %v2220 = vlog2.pop %v2217
      %v2221 = vmul.f32 %v2220, 0.6931472
      %v2222 = vsub.f32 %v2208, %v2219
      %v2223 = vsub.f32 %v2209, %v2221
      %2224 = vst [vmem:[#allocation9] sm:$0xff] %v2222
      %2225 = vst [vmem:[#allocation9 + $0x8] sm:$0xff] %v2223
    $region41: #{tpu_custom_call.1} parent=1 // pred_fallthru
      _
    // Predicated region
    $region42: #{tpu_custom_call.1} parent=1 // pred_check
      _
    $region43: #{tpu_custom_call.1} parent=1 // pred_check_branch
      %2227 = sbr.rel (0) target = $region45
    $region44: #{tpu_custom_call.1} parent=1 // pred_region
      %s2229 = ssub.s32 256, 256
      %2230 = vsyncadd [#allocation5], %s2229
      %s2231 = sshll.u32 [#allocation9], 4
      %s2232 = int_to_ptr.vmem [resolvable:$true] %s2231
      %2237 = dma.vmem_to_hbm [thread:$0]  %s2232, 256, %s5, [#allocation5], 128, 128, 8
    $region45: #{tpu_custom_call.1} parent=1 // pred_fallthru
      _
    // Predicated region
    $region46: #{tpu_custom_call.1} parent=1 // pred_check
      _
    $region47: #{tpu_custom_call.1} parent=1 // pred_check_branch
      %2239 = sbr.rel (0) target = $region49
    $region48: #{tpu_custom_call.1} parent=1 // pred_region
      %2240 = dma.done [#allocation5], 256
    $region49: #{tpu_custom_call.1} parent=1 // pred_fallthru
      _
    %2241 = vsyncpa [#allocation4], 1
    %2242 = vsyncpa [#allocation7], 1
    %2243 = vsyncpa [#allocation5], 1

</llo_original>
